<compile_context>
chip_gen: v5e
topology: v5e:2x2
jax: 0.10.0
libtpu: 0.0.40
codegen_flags: <defaults>
</compile_context>

<pallas_src>
import functools

import numpy as np
import jax
import jax.numpy as jnp
from jax.experimental import pallas as pl
from jax.experimental.pallas import tpu as pltpu

EPS = 1e-5  # nn.GroupNorm default eps


# --------------------------------------------------------------------------
# Host-side (trace-time) constants — depend only on static shapes.
# --------------------------------------------------------------------------
def _interp_matrix(n_out, n_in):
    """(n_out, n_in) 1-D bilinear interpolation matrix, align_corners=True."""
    m = np.zeros((n_out, n_in), np.float32)
    for j in range(n_out):
        src = j * (n_in - 1) / (n_out - 1) if n_out > 1 else 0.0
        s0 = min(max(int(np.floor(src)), 0), n_in - 1)
        s1 = min(s0 + 1, n_in - 1)
        f = src - s0
        m[j, s0] += 1.0 - f
        m[j, s1] += f
    return m


def _upsample_operator(Hh, Wh, H, W):
    """(Hh*Wh, H*W) operator:  up_flat = x_flat @ U  == bilinear resize to (H, W).

    NOTE: at large spatial sizes (>~32x32) this should be replaced by the separable
    (Wh,W)/(Hh,H) two-matmul form; the dense kron is fine (and bf16) at these sizes.
    """
    rh = _interp_matrix(H, Hh)          # (H, Hh)
    rw = _interp_matrix(W, Wh)          # (W, Wh)
    up = np.kron(rh, rw)                # (H*W, Hh*Wh)
    return np.ascontiguousarray(up.T).astype(np.float32)


def _packed_consts(H, W):
    """(11, H*W) f32: rows 0..8 = 3x3 tap zero-pad masks (tap = (oy+1)*3+(ox+1)),
    row 9 = base grid x in [-1,1], row 10 = base grid y in [-1,1]."""
    hh = np.repeat(np.arange(H), W)
    ww = np.tile(np.arange(W), H)
    rows = []
    for oy in (-1, 0, 1):
        for ox in (-1, 0, 1):
            ok = (hh + oy >= 0) & (hh + oy < H) & (ww + ox >= 0) & (ww + ox < W)
            rows.append(ok.astype(np.float32))
    rows.append(np.tile(np.linspace(-1.0, 1.0, W, dtype=np.float32), H))      # gx
    rows.append(np.repeat(np.linspace(-1.0, 1.0, H, dtype=np.float32), W))    # gy
    return np.stack(rows, 0).astype(np.float32)


# --------------------------------------------------------------------------
# Fused FlowUpsample forward kernel (one grid step == one batch sample).
# --------------------------------------------------------------------------
def _flow_upsample_kernel(lf_ref, hf_ref, w_lcr_ref, w_lfl_ref, w_hfl_ref,
                          w_fml_ref, w_fmh_ref, gnp_ref, up_ref, consts_ref,
                          o_ref, *, H, W, Hh, Wh):
    f32, bf16 = jnp.float32, jnp.bfloat16
    HW = H * W
    HhWh = Hh * Wh

    def gn_tanh(y, col):
        # GroupNorm(C, C): per-channel mean / biased variance over the spatial
        # (lane) axis; one-pass variance form; affine params from the packed table.
        C = y.shape[0]
        mean = jnp.mean(y, axis=-1, keepdims=True)
        var = jnp.mean(y * y, axis=-1, keepdims=True) - mean * mean
        g = gnp_ref[0:C, col:col + 1]
        b = gnp_ref[0:C, col + 1:col + 2]
        return jnp.tanh((y - mean) * jax.lax.rsqrt(var + EPS) * g + b)

    lf = lf_ref[0]                      # (Cl, HW)    bf16
    hf = hf_ref[0]                      # (Ch, HhWh)  bf16

    # --- Conv(k=1, bias=False) + GN + Tanh blocks: bf16 channel matmuls (f32 acc) ---
    l_feat = gn_tanh(jnp.dot(w_lcr_ref[...], lf, preferred_element_type=f32), 0)
    l_flow = gn_tanh(jnp.dot(w_lfl_ref[...], l_feat.astype(bf16),
                             preferred_element_type=f32), 2)          # (Co, HW)
    h_flow = gn_tanh(jnp.dot(w_hfl_ref[...], hf,
                             preferred_element_type=f32), 4)          # (Co, HhWh)

    # --- F.interpolate(bilinear, align_corners=True) as one precomputed matmul ---
    h_flow_up = jnp.dot(h_flow.astype(bf16), up_ref[...],
                        preferred_element_type=f32)                   # (Co, HW)

    # --- flow_make: 3x3 conv (pad=1, bias=False) over concat([l_flow, h_flow_up]).
    # One stacked channel-mix matmul for all 9 taps (row = 2*tap + cout), then per-tap
    # pltpu.roll along the flattened lane axis + zero-pad boundary mask.
    mixed = (jnp.dot(w_fml_ref[...], l_flow.astype(bf16), preferred_element_type=f32)
             + jnp.dot(w_fmh_ref[...], h_flow_up.astype(bf16),
                       preferred_element_type=f32))                   # (18, HW)
    acc = None
    t = 0
    for oy in (-1, 0, 1):
        for ox in (-1, 0, 1):
            tap = mixed[2 * t:2 * t + 2, :]
            s = oy * W + ox                    # out[p] needs mixed[p + s]
            if s != 0:
                tap = pltpu.roll(tap, (-s) % HW, axis=1) * consts_ref[t:t + 1, :]
            acc = tap if acc is None else acc + tap
            t += 1
    flow = gn_tanh(acc, 6)                     # (2, HW): [dx, dy]

    # --- flow_warp == grid_sample(h_feature, grid + flow / [W, H]); bilinear,
    # align_corners=True, zero padding.  Built as a (HhWh, HW) bilinear-scatter
    # matrix: d = iota - idx0 compared against {0, 1, Wh, Wh+1}, corner validity
    # folded into the small (1, HW) weights, then ONE MXU matmul consumes it.
    gx = consts_ref[9:10, :] + flow[0:1, :] * (1.0 / W)
    gy = consts_ref[10:11, :] + flow[1:2, :] * (1.0 / H)
    ix = (gx + 1.0) * (0.5 * (Wh - 1))
    iy = (gy + 1.0) * (0.5 * (Hh - 1))
    x0 = jnp.floor(ix)
    y0 = jnp.floor(iy)
    tx = ix - x0
    ty = iy - y0
    x0i = x0.astype(jnp.int32)
    y0i = y0.astype(jnp.int32)
    vx0 = (x0i >= 0) & (x0i < Wh)
    vx1 = (x0i >= -1) & (x0i < Wh - 1)
    vy0 = (y0i >= 0) & (y0i < Hh)
    vy1 = (y0i >= -1) & (y0i < Hh - 1)
    w00 = jnp.where(vy0 & vx0, (1.0 - tx) * (1.0 - ty), 0.0)
    w01 = jnp.where(vy0 & vx1, tx * (1.0 - ty), 0.0)
    w10 = jnp.where(vy1 & vx0, (1.0 - tx) * ty, 0.0)
    w11 = jnp.where(vy1 & vx1, tx * ty, 0.0)

    idx0 = y0i * Wh + x0i                                              # (1, HW)
    d = jax.lax.broadcasted_iota(jnp.int32, (HhWh, HW), 0) - idx0      # (HhWh, HW)
    m = jnp.where(d == 0, w00, 0.0)
    m = m + jnp.where(d == 1, w01, 0.0)
    m = m + jnp.where(d == Wh, w10, 0.0)
    m = m + jnp.where(d == Wh + 1, w11, 0.0)

    h_warp = jnp.dot(hf, m.astype(bf16), preferred_element_type=f32)   # (Ch, HW)

    o_ref[0] = (h_warp + l_feat).astype(o_ref.dtype)


# --------------------------------------------------------------------------
# Wrapper: NCHW in / NCHW out, single pallas_call.
# --------------------------------------------------------------------------
def flow_upsample_forward(params, l_feature, h_feature):
    B, CL, H, W = l_feature.shape
    _, CH, HH, WH = h_feature.shape
    HW, HHWH = H * W, HH * WH
    CO = params["l_flowConv"]["w"].shape[2]
    bf16, f32 = jnp.bfloat16, jnp.float32

    def w1x1(p):                       # (1,1,cout,cin) -> (cout, cin), bf16 for MXU
        w = p["w"]
        return w.reshape(w.shape[2], w.shape[3]).astype(bf16)

    w_lcr = w1x1(params["l_channelRConv"])                 # (CH, CL)
    w_lfl = w1x1(params["l_flowConv"])                     # (CO, CH)
    w_hfl = w1x1(params["h_flowConv"])                     # (CO, CH)

    # flow_make weight layout here: (ky, kx, cout, cin=2*CO).  (A real PyTorch
    # (cout, cin, ky, kx) weight would be permuted to this first.)  cin[:CO]
    # multiplies l_flow, cin[CO:] the upsampled h_flow: torch.cat([l_flow, h_flow], 1).
    fm = params["flow_make"]["w"].reshape(9, 2, 2 * CO)    # (tap, cout, cin)
    w_fm_l = fm[..., :CO].reshape(18, CO).astype(bf16)     # row = 2*tap + cout
    w_fm_h = fm[..., CO:].reshape(18, CO).astype(bf16)

    # Packed GroupNorm affine params: columns (g,b) per block -> (Cmax, 8) f32.
    cmax = max(CH, CO, 2)

    def col(v):
        return jnp.pad(v.astype(f32), (0, cmax - v.shape[0]))

    gnp = jnp.stack(
        [col(params["l_channelRConv"]["g"]), col(params["l_channelRConv"]["b"]),
         col(params["l_flowConv"]["g"]),     col(params["l_flowConv"]["b"]),
         col(params["h_flowConv"]["g"]),     col(params["h_flowConv"]["b"]),
         col(params["flow_make"]["g"]),      col(params["flow_make"]["b"])],
        axis=1)                                            # (cmax, 8)

    up = jnp.asarray(_upsample_operator(HH, WH, H, W), dtype=bf16)    # (HHWH, HW)
    consts = jnp.asarray(_packed_consts(H, W))                        # (11, HW)

    lf = l_feature.reshape(B, CL, HW).astype(bf16)
    hf = h_feature.reshape(B, CH, HHWH).astype(bf16)

    kern = functools.partial(_flow_upsample_kernel, H=H, W=W, Hh=HH, Wh=WH)

    def const_spec(shape):
        zeros = (0,) * len(shape)
        return pl.BlockSpec(shape, lambda b, _z=zeros: _z)

    # Advisory cost estimate (MXU flops + scatter-matrix VPU build; all bytes
    # including the output write).
    flops = (2 * B * (CH * CL * HW + CO * CH * HW + CO * CH * HHWH
                      + CO * HHWH * HW + 2 * 18 * CO * HW + CH * HHWH * HW)
             + 6 * B * HHWH * HW)
    transcendentals = B * (CH * HW + CO * HW + CO * HHWH + 2 * HW)
    bytes_accessed = (2 * B * (CL * HW + CH * HHWH) + 4 * B * CH * HW
                      + 2 * HHWH * HW + 4 * 11 * HW
                      + 2 * (CH * CL + 2 * CO * CH + 36 * CO) + 4 * cmax * 8)

    # Explicit VMEM budget: double-buffered per-batch blocks + constants + allowance
    # for in-kernel (HhWh,HW) scatter-matrix temporaries and activations.
    block_bytes = 2 * (CL * HW + CH * HHWH) + 4 * CH * HW
    const_bytes = (2 * HHWH * HW + 4 * 11 * HW
                   + 2 * (CH * CL + 2 * CO * CH + 36 * CO) + 4 * cmax * 8)
    scratch_bytes = 4 * (6 * HHWH * HW + 12 * CH * HW + 20 * HW)
    vmem_limit = int(max(8 * 1024 * 1024,
                         min(2 * (2 * block_bytes + 2 * const_bytes + scratch_bytes),
                             48 * 1024 * 1024)))

    out = pl.pallas_call(
        kern,
        out_shape=jax.ShapeDtypeStruct((B, CH, HW), l_feature.dtype),
        grid=(B,),
        in_specs=[
            pl.BlockSpec((1, CL, HW), lambda b: (b, 0, 0)),
            pl.BlockSpec((1, CH, HHWH), lambda b: (b, 0, 0)),
            const_spec((CH, CL)), const_spec((CO, CH)), const_spec((CO, CH)),
            const_spec((18, CO)), const_spec((18, CO)),
            const_spec((cmax, 8)), const_spec((HHWH, HW)), const_spec((11, HW)),
        ],
        out_specs=pl.BlockSpec((1, CH, HW), lambda b: (b, 0, 0)),
        compiler_params=pltpu.CompilerParams(
            dimension_semantics=("parallel",),
            vmem_limit_bytes=vmem_limit),
        cost_estimate=pl.CostEstimate(flops=flops,
                                      transcendentals=transcendentals,
                                      bytes_accessed=bytes_accessed),
    )(lf, hf, w_lcr, w_lfl, w_hfl, w_fm_l, w_fm_h, gnp, up, consts)

    return out.reshape(B, CH, H, W)


# --------------------------------------------------------------------------
# Pure-JAX f32 reference (mirrors the PyTorch module) for correctness checking.
# --------------------------------------------------------------------------
def _ref_conv_gn_tanh(x, p):
    w = p["w"]                           # (k, k, cout, cin)
    k, cout = w.shape[0], w.shape[2]
    if k == 1:
        y = jnp.einsum('oc,bchw->bohw', w[0, 0], x)
    else:
        pad = k // 2
        xp = jnp.pad(x, ((0, 0), (0, 0), (pad, pad), (pad, pad)))
        y = jnp.zeros((x.shape[0], cout, x.shape[2], x.shape[3]), x.dtype)
        for ky in range(k):
            for kx in range(k):
                y = y + jnp.einsum('oc,bchw->bohw', w[ky, kx],
                                   xp[:, :, ky:ky + x.shape[2], kx:kx + x.shape[3]])
    mean = y.mean(axis=(2, 3), keepdims=True)
    var = y.var(axis=(2, 3), keepdims=True)
    yn = (y - mean) / jnp.sqrt(var + EPS)
    g = p["g"].reshape(1, cout, 1, 1)
    b = p["b"].reshape(1, cout, 1, 1)
    return jnp.tanh(yn * g + b)


def _ref_interpolate(x, H, W):
    rh = jnp.asarray(_interp_matrix(H, x.shape[2]))
    rw = jnp.asarray(_interp_matrix(W, x.shape[3]))
    return jnp.einsum('Hh,bchw,Ww->bcHW', rh, x, rw)


def _ref_grid_sample(inp, gx, gy):
    """Bilinear grid_sample, align_corners=True, zero padding. gx/gy: (B, H, W)."""
    B, C, Hh, Wh = inp.shape
    ix = (gx + 1.0) * 0.5 * (Wh - 1)
    iy = (gy + 1.0) * 0.5 * (Hh - 1)
    x0 = jnp.floor(ix)
    y0 = jnp.floor(iy)
    tx = ix - x0
    ty = iy - y0
    x0 = x0.astype(jnp.int32)
    y0 = y0.astype(jnp.int32)
    bi = jnp.arange(B)[:, None, None, None]
    ci = jnp.arange(C)[None, :, None, None]

    def corner(yi, xi, wgt):
        valid = (xi >= 0) & (xi < Wh) & (yi >= 0) & (yi < Hh)
        v = inp[bi, ci, jnp.clip(yi, 0, Hh - 1)[:, None], jnp.clip(xi, 0, Wh - 1)[:, None]]
        return v * (wgt * valid.astype(inp.dtype))[:, None]

    return (corner(y0, x0, (1 - tx) * (1 - ty)) + corner(y0, x0 + 1, tx * (1 - ty))
            + corner(y0 + 1, x0, (1 - tx) * ty) + corner(y0 + 1, x0 + 1, tx * ty))


def flow_upsample_reference(params, l_feature, h_feature):
    B, _, H, W = l_feature.shape
    l_feat = _ref_conv_gn_tanh(l_feature, params["l_channelRConv"])
    l_flow = _ref_conv_gn_tanh(l_feat, params["l_flowConv"])
    h_flow = _ref_conv_gn_tanh(h_feature, params["h_flowConv"])
    h_flow = _ref_interpolate(h_flow, H, W)
    flow = _ref_conv_gn_tanh(jnp.concatenate([l_flow, h_flow], axis=1),
                             params["flow_make"])
    base_x = jnp.broadcast_to(jnp.linspace(-1.0, 1.0, W)[None, None, :], (B, H, W))
    base_y = jnp.broadcast_to(jnp.linspace(-1.0, 1.0, H)[None, :, None], (B, H, W))
    gx = base_x + flow[:, 0] / W
    gy = base_y + flow[:, 1] / H
    warped = _ref_grid_sample(h_feature, gx, gy)
    return warped + l_feat


# --------------------------------------------------------------------------
# Deterministic synthetic parameters (conv bias=False; GN gamma=1, beta=0 defaults).
# --------------------------------------------------------------------------
def init_params(key, l_channelin, h_channelin, outchannel):
    ks = jax.random.split(key, 4)

    def conv_block(k, cin, cout, ksize):
        w = jax.random.normal(k, (ksize, ksize, cout, cin), jnp.float32)
        w = w * (1.0 / (ksize * ksize * cin)) ** 0.5
        return {"w": w,
                "g": jnp.ones((cout,), jnp.float32),
                "b": jnp.zeros((cout,), jnp.float32)}

    return {
        "l_channelRConv": conv_block(ks[0], l_channelin, h_channelin, 1),
        "l_flowConv":     conv_block(ks[1], h_channelin, outchannel, 1),
        "h_flowConv":     conv_block(ks[2], h_channelin, outchannel, 1),
        "flow_make":      conv_block(ks[3], 2 * outchannel, 2, 3),
    }


if __name__ == "__main__":
    B, L_CIN, H_CIN, OUTC = 2, 4, 8, 4
    H = W = 16          # l_feature (high-res) spatial size
    HH = WH = 8         # h_feature (low-res) spatial size

    key = jax.random.PRNGKey(0)
    kp, kl, kh = jax.random.split(key, 3)
    params = init_params(kp, L_CIN, H_CIN, OUTC)
    l_feature = jax.random.normal(kl, (B, L_CIN, H, W), jnp.float32)
    h_feature = jax.random.normal(kh, (B, H_CIN, HH, WH), jnp.float32)

    out = jax.jit(flow_upsample_forward)(params, l_feature, h_feature)
    jax.block_until_ready(out)
    assert out.shape == (B, H_CIN, H, W)
    assert bool(jnp.all(jnp.isfinite(out)))

    # Cross-check against the pure-JAX f32 reference (kernel uses bf16 on the MXU,
    # so allow a small elementwise tolerance).
    ref = flow_upsample_reference(params, l_feature, h_feature)
    err = jnp.abs(out.astype(jnp.float32) - ref)
    max_err, mean_err = float(jnp.max(err)), float(jnp.mean(err))
    assert max_err < 0.15 and mean_err < 0.02, (max_err, mean_err)
    print("KERNEL_OK")
</pallas_src>

<mosaic_0001>
module attributes {stable_mosaic.version = 11 : i64} {
  func.func @_flow_upsample_kernel(%arg0: i32, %arg1: memref<1x4x256xbf16, #tpu.memory_space<vmem>>, %arg2: memref<1x8x64xbf16, #tpu.memory_space<vmem>>, %arg3: memref<8x4xbf16, #tpu.memory_space<vmem>>, %arg4: memref<4x8xbf16, #tpu.memory_space<vmem>>, %arg5: memref<4x8xbf16, #tpu.memory_space<vmem>>, %arg6: memref<18x4xbf16, #tpu.memory_space<vmem>>, %arg7: memref<18x4xbf16, #tpu.memory_space<vmem>>, %arg8: memref<8x8xf32, #tpu.memory_space<vmem>>, %arg9: memref<64x256xbf16, #tpu.memory_space<vmem>>, %arg10: memref<11x256xf32, #tpu.memory_space<vmem>>, %arg11: memref<1x8x256xf32, #tpu.memory_space<vmem>>) attributes {dimension_semantics = [#tpu.dimension_semantics<parallel>], iteration_bounds = array<i64: 2>, scalar_prefetch = 0 : i64, scratch_operands = 0 : i64, tpu.core_type = #tpu.core_type<tc>, window_params = [{transform_indices = @transform_0, window_bounds = array<i64: 1, 4, 256>}, {transform_indices = @transform_1, window_bounds = array<i64: 1, 8, 64>}, {pipeline_mode = #tpu.pipeline_mode<synchronous>, transform_indices = @transform_2, window_bounds = array<i64: 8, 4>}, {pipeline_mode = #tpu.pipeline_mode<synchronous>, transform_indices = @transform_3, window_bounds = array<i64: 4, 8>}, {pipeline_mode = #tpu.pipeline_mode<synchronous>, transform_indices = @transform_4, window_bounds = array<i64: 4, 8>}, {pipeline_mode = #tpu.pipeline_mode<synchronous>, transform_indices = @transform_5, window_bounds = array<i64: 18, 4>}, {pipeline_mode = #tpu.pipeline_mode<synchronous>, transform_indices = @transform_6, window_bounds = array<i64: 18, 4>}, {pipeline_mode = #tpu.pipeline_mode<synchronous>, transform_indices = @transform_7, window_bounds = array<i64: 8, 8>}, {pipeline_mode = #tpu.pipeline_mode<synchronous>, transform_indices = @transform_8, window_bounds = array<i64: 64, 256>}, {pipeline_mode = #tpu.pipeline_mode<synchronous>, transform_indices = @transform_9, window_bounds = array<i64: 11, 256>}, {transform_indices = @transform_10, window_bounds = array<i64: 1, 8, 256>}]} {
    %c0 = arith.constant 0 : index
    %c0_0 = arith.constant 0 : index
    %c0_1 = arith.constant 0 : index
    %0 = vector.load %arg1[%c0, %c0_0, %c0_1] : memref<1x4x256xbf16, #tpu.memory_space<vmem>>, vector<1x4x256xbf16>
    %1 = vector.shape_cast %0 : vector<1x4x256xbf16> to vector<4x256xbf16>
    %c0_2 = arith.constant 0 : index
    %c0_3 = arith.constant 0 : index
    %c0_4 = arith.constant 0 : index
    %2 = vector.load %arg2[%c0_2, %c0_3, %c0_4] : memref<1x8x64xbf16, #tpu.memory_space<vmem>>, vector<1x8x64xbf16>
    %3 = vector.shape_cast %2 : vector<1x8x64xbf16> to vector<8x64xbf16>
    %c0_5 = arith.constant 0 : index
    %c0_6 = arith.constant 0 : index
    %4 = vector.load %arg3[%c0_5, %c0_6] : memref<8x4xbf16, #tpu.memory_space<vmem>>, vector<8x4xbf16>
    %cst = arith.constant dense<0.000000e+00> : vector<8x256xf32>
    %5 = tpu.matmul %4, %1, %cst {dimension_numbers = #tpu.dot_dimension_numbers<[1], [0], [0], [1], [0, 0, 1, 1], [], []>} : vector<8x4xbf16>, vector<4x256xbf16>, vector<8x256xf32> -> vector<8x256xf32>
    %cst_7 = arith.constant dense<0.000000e+00> : vector<8xf32>
    %6 = vector.multi_reduction <add>, %5, %cst_7 [1] : vector<8x256xf32> to vector<8xf32>
    %7 = vector.shape_cast %6 : vector<8xf32> to vector<8x1xf32>
    %cst_8 = arith.constant 2.560000e+02 : f32
    %8 = vector.broadcast %cst_8 : f32 to vector<8x1xf32>
    %9 = arith.divf %7, %8 : vector<8x1xf32>
    %10 = arith.mulf %5, %5 : vector<8x256xf32>
    %cst_9 = arith.constant dense<0.000000e+00> : vector<8xf32>
    %11 = vector.multi_reduction <add>, %10, %cst_9 [1] : vector<8x256xf32> to vector<8xf32>
    %12 = vector.shape_cast %11 : vector<8xf32> to vector<8x1xf32>
    %cst_10 = arith.constant 2.560000e+02 : f32
    %13 = vector.broadcast %cst_10 : f32 to vector<8x1xf32>
    %14 = arith.divf %12, %13 : vector<8x1xf32>
    %15 = arith.mulf %9, %9 : vector<8x1xf32>
    %16 = arith.subf %14, %15 : vector<8x1xf32>
    %c0_11 = arith.constant 0 : index
    %c0_12 = arith.constant 0 : index
    %17 = vector.load %arg8[%c0_11, %c0_12] : memref<8x8xf32, #tpu.memory_space<vmem>>, vector<8x1xf32>
    %c0_13 = arith.constant 0 : index
    %c1 = arith.constant 1 : index
    %18 = vector.load %arg8[%c0_13, %c1] : memref<8x8xf32, #tpu.memory_space<vmem>>, vector<8x1xf32>
    %19 = vector.broadcast %9 : vector<8x1xf32> to vector<8x256xf32>
    %20 = arith.subf %5, %19 : vector<8x256xf32>
    %cst_14 = arith.constant 9.99999974E-6 : f32
    %21 = vector.broadcast %cst_14 : f32 to vector<8x1xf32>
    %22 = arith.addf %16, %21 : vector<8x1xf32>
    %23 = math.rsqrt %22 : vector<8x1xf32>
    %24 = vector.broadcast %23 : vector<8x1xf32> to vector<8x256xf32>
    %25 = arith.mulf %20, %24 : vector<8x256xf32>
    %26 = vector.broadcast %17 : vector<8x1xf32> to vector<8x256xf32>
    %27 = arith.mulf %25, %26 : vector<8x256xf32>
    %28 = vector.broadcast %18 : vector<8x1xf32> to vector<8x256xf32>
    %29 = arith.addf %27, %28 : vector<8x256xf32>
    %30 = math.tanh %29 : vector<8x256xf32>
    %c0_15 = arith.constant 0 : index
    %c0_16 = arith.constant 0 : index
    %31 = vector.load %arg4[%c0_15, %c0_16] : memref<4x8xbf16, #tpu.memory_space<vmem>>, vector<4x8xbf16>
    %32 = arith.truncf %30 : vector<8x256xf32> to vector<8x256xbf16>
    %cst_17 = arith.constant dense<0.000000e+00> : vector<4x256xf32>
    %33 = tpu.matmul %31, %32, %cst_17 {dimension_numbers = #tpu.dot_dimension_numbers<[1], [0], [0], [1], [0, 0, 1, 1], [], []>} : vector<4x8xbf16>, vector<8x256xbf16>, vector<4x256xf32> -> vector<4x256xf32>
    %cst_18 = arith.constant dense<0.000000e+00> : vector<4xf32>
    %34 = vector.multi_reduction <add>, %33, %cst_18 [1] : vector<4x256xf32> to vector<4xf32>
    %35 = vector.shape_cast %34 : vector<4xf32> to vector<4x1xf32>
    %cst_19 = arith.constant 2.560000e+02 : f32
    %36 = vector.broadcast %cst_19 : f32 to vector<4x1xf32>
    %37 = arith.divf %35, %36 : vector<4x1xf32>
    %38 = arith.mulf %33, %33 : vector<4x256xf32>
    %cst_20 = arith.constant dense<0.000000e+00> : vector<4xf32>
    %39 = vector.multi_reduction <add>, %38, %cst_20 [1] : vector<4x256xf32> to vector<4xf32>
    %40 = vector.shape_cast %39 : vector<4xf32> to vector<4x1xf32>
    %cst_21 = arith.constant 2.560000e+02 : f32
    %41 = vector.broadcast %cst_21 : f32 to vector<4x1xf32>
    %42 = arith.divf %40, %41 : vector<4x1xf32>
    %43 = arith.mulf %37, %37 : vector<4x1xf32>
    %44 = arith.subf %42, %43 : vector<4x1xf32>
    %c0_22 = arith.constant 0 : index
    %c2 = arith.constant 2 : index
    %45 = vector.load %arg8[%c0_22, %c2] : memref<8x8xf32, #tpu.memory_space<vmem>>, vector<4x1xf32>
    %c0_23 = arith.constant 0 : index
    %c3 = arith.constant 3 : index
    %46 = vector.load %arg8[%c0_23, %c3] : memref<8x8xf32, #tpu.memory_space<vmem>>, vector<4x1xf32>
    %47 = vector.broadcast %37 : vector<4x1xf32> to vector<4x256xf32>
    %48 = arith.subf %33, %47 : vector<4x256xf32>
    %cst_24 = arith.constant 9.99999974E-6 : f32
    %49 = vector.broadcast %cst_24 : f32 to vector<4x1xf32>
    %50 = arith.addf %44, %49 : vector<4x1xf32>
    %51 = math.rsqrt %50 : vector<4x1xf32>
    %52 = vector.broadcast %51 : vector<4x1xf32> to vector<4x256xf32>
    %53 = arith.mulf %48, %52 : vector<4x256xf32>
    %54 = vector.broadcast %45 : vector<4x1xf32> to vector<4x256xf32>
    %55 = arith.mulf %53, %54 : vector<4x256xf32>
    %56 = vector.broadcast %46 : vector<4x1xf32> to vector<4x256xf32>
    %57 = arith.addf %55, %56 : vector<4x256xf32>
    %58 = math.tanh %57 : vector<4x256xf32>
    %c0_25 = arith.constant 0 : index
    %c0_26 = arith.constant 0 : index
    %59 = vector.load %arg5[%c0_25, %c0_26] : memref<4x8xbf16, #tpu.memory_space<vmem>>, vector<4x8xbf16>
    %cst_27 = arith.constant dense<0.000000e+00> : vector<4x64xf32>
    %60 = tpu.matmul %59, %3, %cst_27 {dimension_numbers = #tpu.dot_dimension_numbers<[1], [0], [0], [1], [0, 0, 1, 1], [], []>} : vector<4x8xbf16>, vector<8x64xbf16>, vector<4x64xf32> -> vector<4x64xf32>
    %cst_28 = arith.constant dense<0.000000e+00> : vector<4xf32>
    %61 = vector.multi_reduction <add>, %60, %cst_28 [1] : vector<4x64xf32> to vector<4xf32>
    %62 = vector.shape_cast %61 : vector<4xf32> to vector<4x1xf32>
    %cst_29 = arith.constant 6.400000e+01 : f32
    %63 = vector.broadcast %cst_29 : f32 to vector<4x1xf32>
    %64 = arith.divf %62, %63 : vector<4x1xf32>
    %65 = arith.mulf %60, %60 : vector<4x64xf32>
    %cst_30 = arith.constant dense<0.000000e+00> : vector<4xf32>
    %66 = vector.multi_reduction <add>, %65, %cst_30 [1] : vector<4x64xf32> to vector<4xf32>
    %67 = vector.shape_cast %66 : vector<4xf32> to vector<4x1xf32>
    %cst_31 = arith.constant 6.400000e+01 : f32
    %68 = vector.broadcast %cst_31 : f32 to vector<4x1xf32>
    %69 = arith.divf %67, %68 : vector<4x1xf32>
    %70 = arith.mulf %64, %64 : vector<4x1xf32>
    %71 = arith.subf %69, %70 : vector<4x1xf32>
    %c0_32 = arith.constant 0 : index
    %c4 = arith.constant 4 : index
    %72 = vector.load %arg8[%c0_32, %c4] : memref<8x8xf32, #tpu.memory_space<vmem>>, vector<4x1xf32>
    %c0_33 = arith.constant 0 : index
    %c5 = arith.constant 5 : index
    %73 = vector.load %arg8[%c0_33, %c5] : memref<8x8xf32, #tpu.memory_space<vmem>>, vector<4x1xf32>
    %74 = vector.broadcast %64 : vector<4x1xf32> to vector<4x64xf32>
    %75 = arith.subf %60, %74 : vector<4x64xf32>
    %cst_34 = arith.constant 9.99999974E-6 : f32
    %76 = vector.broadcast %cst_34 : f32 to vector<4x1xf32>
    %77 = arith.addf %71, %76 : vector<4x1xf32>
    %78 = math.rsqrt %77 : vector<4x1xf32>
    %79 = vector.broadcast %78 : vector<4x1xf32> to vector<4x64xf32>
    %80 = arith.mulf %75, %79 : vector<4x64xf32>
    %81 = vector.broadcast %72 : vector<4x1xf32> to vector<4x64xf32>
    %82 = arith.mulf %80, %81 : vector<4x64xf32>
    %83 = vector.broadcast %73 : vector<4x1xf32> to vector<4x64xf32>
    %84 = arith.addf %82, %83 : vector<4x64xf32>
    %85 = math.tanh %84 : vector<4x64xf32>
    %86 = arith.truncf %85 : vector<4x64xf32> to vector<4x64xbf16>
    %c0_35 = arith.constant 0 : index
    %c0_36 = arith.constant 0 : index
    %87 = vector.load %arg9[%c0_35, %c0_36] : memref<64x256xbf16, #tpu.memory_space<vmem>>, vector<64x256xbf16>
    %cst_37 = arith.constant dense<0.000000e+00> : vector<4x256xf32>
    %88 = tpu.matmul %86, %87, %cst_37 {dimension_numbers = #tpu.dot_dimension_numbers<[1], [0], [0], [1], [0, 0, 1, 1], [], []>} : vector<4x64xbf16>, vector<64x256xbf16>, vector<4x256xf32> -> vector<4x256xf32>
    %c0_38 = arith.constant 0 : index
    %c0_39 = arith.constant 0 : index
    %89 = vector.load %arg6[%c0_38, %c0_39] : memref<18x4xbf16, #tpu.memory_space<vmem>>, vector<18x4xbf16>
    %90 = arith.truncf %58 : vector<4x256xf32> to vector<4x256xbf16>
    %cst_40 = arith.constant dense<0.000000e+00> : vector<18x256xf32>
    %91 = tpu.matmul %89, %90, %cst_40 {dimension_numbers = #tpu.dot_dimension_numbers<[1], [0], [0], [1], [0, 0, 1, 1], [], []>} : vector<18x4xbf16>, vector<4x256xbf16>, vector<18x256xf32> -> vector<18x256xf32>
    %c0_41 = arith.constant 0 : index
    %c0_42 = arith.constant 0 : index
    %92 = vector.load %arg7[%c0_41, %c0_42] : memref<18x4xbf16, #tpu.memory_space<vmem>>, vector<18x4xbf16>
    %93 = arith.truncf %88 : vector<4x256xf32> to vector<4x256xbf16>
    %cst_43 = arith.constant dense<0.000000e+00> : vector<18x256xf32>
    %94 = tpu.matmul %92, %93, %cst_43 {dimension_numbers = #tpu.dot_dimension_numbers<[1], [0], [0], [1], [0, 0, 1, 1], [], []>} : vector<18x4xbf16>, vector<4x256xbf16>, vector<18x256xf32> -> vector<18x256xf32>
    %95 = arith.addf %91, %94 : vector<18x256xf32>
    %96 = vector.extract_strided_slice %95 {offsets = [0, 0], sizes = [2, 256], strides = [1, 1]} : vector<18x256xf32> to vector<2x256xf32>
    %c17_i32 = arith.constant 17 : i32
    %97 = tpu.dynamic_rotate %96 by %c17_i32 dim 1 : vector<2x256xf32>, i32 -> vector<2x256xf32>
    %c0_44 = arith.constant 0 : index
    %c0_45 = arith.constant 0 : index
    %98 = vector.load %arg10[%c0_44, %c0_45] : memref<11x256xf32, #tpu.memory_space<vmem>>, vector<1x256xf32>
    %99 = vector.broadcast %98 : vector<1x256xf32> to vector<2x256xf32>
    %100 = arith.mulf %97, %99 : vector<2x256xf32>
    %101 = vector.extract_strided_slice %95 {offsets = [2, 0], sizes = [2, 256], strides = [1, 1]} : vector<18x256xf32> to vector<2x256xf32>
    %c16_i32 = arith.constant 16 : i32
    %102 = tpu.dynamic_rotate %101 by %c16_i32 dim 1 : vector<2x256xf32>, i32 -> vector<2x256xf32>
    %c1_46 = arith.constant 1 : index
    %c0_47 = arith.constant 0 : index
    %103 = vector.load %arg10[%c1_46, %c0_47] : memref<11x256xf32, #tpu.memory_space<vmem>>, vector<1x256xf32>
    %104 = vector.broadcast %103 : vector<1x256xf32> to vector<2x256xf32>
    %105 = arith.mulf %102, %104 : vector<2x256xf32>
    %106 = arith.addf %100, %105 : vector<2x256xf32>
    %107 = vector.extract_strided_slice %95 {offsets = [4, 0], sizes = [2, 256], strides = [1, 1]} : vector<18x256xf32> to vector<2x256xf32>
    %c15_i32 = arith.constant 15 : i32
    %108 = tpu.dynamic_rotate %107 by %c15_i32 dim 1 : vector<2x256xf32>, i32 -> vector<2x256xf32>
    %c2_48 = arith.constant 2 : index
    %c0_49 = arith.constant 0 : index
    %109 = vector.load %arg10[%c2_48, %c0_49] : memref<11x256xf32, #tpu.memory_space<vmem>>, vector<1x256xf32>
    %110 = vector.broadcast %109 : vector<1x256xf32> to vector<2x256xf32>
    %111 = arith.mulf %108, %110 : vector<2x256xf32>
    %112 = arith.addf %106, %111 : vector<2x256xf32>
    %113 = vector.extract_strided_slice %95 {offsets = [6, 0], sizes = [2, 256], strides = [1, 1]} : vector<18x256xf32> to vector<2x256xf32>
    %c1_i32 = arith.constant 1 : i32
    %114 = tpu.dynamic_rotate %113 by %c1_i32 dim 1 : vector<2x256xf32>, i32 -> vector<2x256xf32>
    %c3_50 = arith.constant 3 : index
    %c0_51 = arith.constant 0 : index
    %115 = vector.load %arg10[%c3_50, %c0_51] : memref<11x256xf32, #tpu.memory_space<vmem>>, vector<1x256xf32>
    %116 = vector.broadcast %115 : vector<1x256xf32> to vector<2x256xf32>
    %117 = arith.mulf %114, %116 : vector<2x256xf32>
    %118 = arith.addf %112, %117 : vector<2x256xf32>
    %119 = vector.extract_strided_slice %95 {offsets = [8, 0], sizes = [2, 256], strides = [1, 1]} : vector<18x256xf32> to vector<2x256xf32>
    %120 = arith.addf %118, %119 : vector<2x256xf32>
    %121 = vector.extract_strided_slice %95 {offsets = [10, 0], sizes = [2, 256], strides = [1, 1]} : vector<18x256xf32> to vector<2x256xf32>
    %c255_i32 = arith.constant 255 : i32
    %122 = tpu.dynamic_rotate %121 by %c255_i32 dim 1 : vector<2x256xf32>, i32 -> vector<2x256xf32>
    %c5_52 = arith.constant 5 : index
    %c0_53 = arith.constant 0 : index
    %123 = vector.load %arg10[%c5_52, %c0_53] : memref<11x256xf32, #tpu.memory_space<vmem>>, vector<1x256xf32>
    %124 = vector.broadcast %123 : vector<1x256xf32> to vector<2x256xf32>
    %125 = arith.mulf %122, %124 : vector<2x256xf32>
    %126 = arith.addf %120, %125 : vector<2x256xf32>
    %127 = vector.extract_strided_slice %95 {offsets = [12, 0], sizes = [2, 256], strides = [1, 1]} : vector<18x256xf32> to vector<2x256xf32>
    %c241_i32 = arith.constant 241 : i32
    %128 = tpu.dynamic_rotate %127 by %c241_i32 dim 1 : vector<2x256xf32>, i32 -> vector<2x256xf32>
    %c6 = arith.constant 6 : index
    %c0_54 = arith.constant 0 : index
    %129 = vector.load %arg10[%c6, %c0_54] : memref<11x256xf32, #tpu.memory_space<vmem>>, vector<1x256xf32>
    %130 = vector.broadcast %129 : vector<1x256xf32> to vector<2x256xf32>
    %131 = arith.mulf %128, %130 : vector<2x256xf32>
    %132 = arith.addf %126, %131 : vector<2x256xf32>
    %133 = vector.extract_strided_slice %95 {offsets = [14, 0], sizes = [2, 256], strides = [1, 1]} : vector<18x256xf32> to vector<2x256xf32>
    %c240_i32 = arith.constant 240 : i32
    %134 = tpu.dynamic_rotate %133 by %c240_i32 dim 1 : vector<2x256xf32>, i32 -> vector<2x256xf32>
    %c7 = arith.constant 7 : index
    %c0_55 = arith.constant 0 : index
    %135 = vector.load %arg10[%c7, %c0_55] : memref<11x256xf32, #tpu.memory_space<vmem>>, vector<1x256xf32>
    %136 = vector.broadcast %135 : vector<1x256xf32> to vector<2x256xf32>
    %137 = arith.mulf %134, %136 : vector<2x256xf32>
    %138 = arith.addf %132, %137 : vector<2x256xf32>
    %139 = vector.extract_strided_slice %95 {offsets = [16, 0], sizes = [2, 256], strides = [1, 1]} : vector<18x256xf32> to vector<2x256xf32>
    %c239_i32 = arith.constant 239 : i32
    %140 = tpu.dynamic_rotate %139 by %c239_i32 dim 1 : vector<2x256xf32>, i32 -> vector<2x256xf32>
    %c8 = arith.constant 8 : index
    %c0_56 = arith.constant 0 : index
    %141 = vector.load %arg10[%c8, %c0_56] : memref<11x256xf32, #tpu.memory_space<vmem>>, vector<1x256xf32>
    %142 = vector.broadcast %141 : vector<1x256xf32> to vector<2x256xf32>
    %143 = arith.mulf %140, %142 : vector<2x256xf32>
    %144 = arith.addf %138, %143 : vector<2x256xf32>
    %cst_57 = arith.constant dense<0.000000e+00> : vector<2xf32>
    %145 = vector.multi_reduction <add>, %144, %cst_57 [1] : vector<2x256xf32> to vector<2xf32>
    %146 = vector.shape_cast %145 : vector<2xf32> to vector<2x1xf32>
    %cst_58 = arith.constant 2.560000e+02 : f32
    %147 = vector.broadcast %cst_58 : f32 to vector<2x1xf32>
    %148 = arith.divf %146, %147 : vector<2x1xf32>
    %149 = arith.mulf %144, %144 : vector<2x256xf32>
    %cst_59 = arith.constant dense<0.000000e+00> : vector<2xf32>
    %150 = vector.multi_reduction <add>, %149, %cst_59 [1] : vector<2x256xf32> to vector<2xf32>
    %151 = vector.shape_cast %150 : vector<2xf32> to vector<2x1xf32>
    %cst_60 = arith.constant 2.560000e+02 : f32
    %152 = vector.broadcast %cst_60 : f32 to vector<2x1xf32>
    %153 = arith.divf %151, %152 : vector<2x1xf32>
    %154 = arith.mulf %148, %148 : vector<2x1xf32>
    %155 = arith.subf %153, %154 : vector<2x1xf32>
    %c0_61 = arith.constant 0 : index
    %c6_62 = arith.constant 6 : index
    %156 = vector.load %arg8[%c0_61, %c6_62] : memref<8x8xf32, #tpu.memory_space<vmem>>, vector<2x1xf32>
    %c0_63 = arith.constant 0 : index
    %c7_64 = arith.constant 7 : index
    %157 = vector.load %arg8[%c0_63, %c7_64] : memref<8x8xf32, #tpu.memory_space<vmem>>, vector<2x1xf32>
    %158 = vector.broadcast %148 : vector<2x1xf32> to vector<2x256xf32>
    %159 = arith.subf %144, %158 : vector<2x256xf32>
    %cst_65 = arith.constant 9.99999974E-6 : f32
    %160 = vector.broadcast %cst_65 : f32 to vector<2x1xf32>
    %161 = arith.addf %155, %160 : vector<2x1xf32>
    %162 = math.rsqrt %161 : vector<2x1xf32>
    %163 = vector.broadcast %162 : vector<2x1xf32> to vector<2x256xf32>
    %164 = arith.mulf %159, %163 : vector<2x256xf32>
    %165 = vector.broadcast %156 : vector<2x1xf32> to vector<2x256xf32>
    %166 = arith.mulf %164, %165 : vector<2x256xf32>
    %167 = vector.broadcast %157 : vector<2x1xf32> to vector<2x256xf32>
    %168 = arith.addf %166, %167 : vector<2x256xf32>
    %169 = math.tanh %168 : vector<2x256xf32>
    %c9 = arith.constant 9 : index
    %c0_66 = arith.constant 0 : index
    %170 = vector.load %arg10[%c9, %c0_66] : memref<11x256xf32, #tpu.memory_space<vmem>>, vector<1x256xf32>
    %171 = vector.extract_strided_slice %169 {offsets = [0, 0], sizes = [1, 256], strides = [1, 1]} : vector<2x256xf32> to vector<1x256xf32>
    %cst_67 = arith.constant 6.250000e-02 : f32
    %172 = vector.broadcast %cst_67 : f32 to vector<1x256xf32>
    %173 = arith.mulf %171, %172 : vector<1x256xf32>
    %174 = arith.addf %170, %173 : vector<1x256xf32>
    %c10 = arith.constant 10 : index
    %c0_68 = arith.constant 0 : index
    %175 = vector.load %arg10[%c10, %c0_68] : memref<11x256xf32, #tpu.memory_space<vmem>>, vector<1x256xf32>
    %176 = vector.extract_strided_slice %169 {offsets = [1, 0], sizes = [1, 256], strides = [1, 1]} : vector<2x256xf32> to vector<1x256xf32>
    %cst_69 = arith.constant 6.250000e-02 : f32
    %177 = vector.broadcast %cst_69 : f32 to vector<1x256xf32>
    %178 = arith.mulf %176, %177 : vector<1x256xf32>
    %179 = arith.addf %175, %178 : vector<1x256xf32>
    %cst_70 = arith.constant 1.000000e+00 : f32
    %180 = vector.broadcast %cst_70 : f32 to vector<1x256xf32>
    %181 = arith.addf %174, %180 : vector<1x256xf32>
    %cst_71 = arith.constant 3.500000e+00 : f32
    %182 = vector.broadcast %cst_71 : f32 to vector<1x256xf32>
    %183 = arith.mulf %181, %182 : vector<1x256xf32>
    %cst_72 = arith.constant 1.000000e+00 : f32
    %184 = vector.broadcast %cst_72 : f32 to vector<1x256xf32>
    %185 = arith.addf %179, %184 : vector<1x256xf32>
    %cst_73 = arith.constant 3.500000e+00 : f32
    %186 = vector.broadcast %cst_73 : f32 to vector<1x256xf32>
    %187 = arith.mulf %185, %186 : vector<1x256xf32>
    %188 = math.floor %183 : vector<1x256xf32>
    %189 = math.floor %187 : vector<1x256xf32>
    %190 = arith.subf %183, %188 : vector<1x256xf32>
    %191 = arith.subf %187, %189 : vector<1x256xf32>
    %192 = arith.fptosi %188 : vector<1x256xf32> to vector<1x256xi32>
    %193 = arith.fptosi %189 : vector<1x256xf32> to vector<1x256xi32>
    %c0_i32 = arith.constant 0 : i32
    %194 = vector.broadcast %c0_i32 : i32 to vector<1x256xi32>
    %195 = arith.cmpi sge, %192, %194 : vector<1x256xi32>
    %c8_i32 = arith.constant 8 : i32
    %196 = vector.broadcast %c8_i32 : i32 to vector<1x256xi32>
    %197 = arith.cmpi slt, %192, %196 : vector<1x256xi32>
    %198 = arith.andi %195, %197 : vector<1x256xi1>
    %c-1_i32 = arith.constant -1 : i32
    %199 = vector.broadcast %c-1_i32 : i32 to vector<1x256xi32>
    %200 = arith.cmpi sge, %192, %199 : vector<1x256xi32>
    %c7_i32 = arith.constant 7 : i32
    %201 = vector.broadcast %c7_i32 : i32 to vector<1x256xi32>
    %202 = arith.cmpi slt, %192, %201 : vector<1x256xi32>
    %203 = arith.andi %200, %202 : vector<1x256xi1>
    %c0_i32_74 = arith.constant 0 : i32
    %204 = vector.broadcast %c0_i32_74 : i32 to vector<1x256xi32>
    %205 = arith.cmpi sge, %193, %204 : vector<1x256xi32>
    %c8_i32_75 = arith.constant 8 : i32
    %206 = vector.broadcast %c8_i32_75 : i32 to vector<1x256xi32>
    %207 = arith.cmpi slt, %193, %206 : vector<1x256xi32>
    %208 = arith.andi %205, %207 : vector<1x256xi1>
    %c-1_i32_76 = arith.constant -1 : i32
    %209 = vector.broadcast %c-1_i32_76 : i32 to vector<1x256xi32>
    %210 = arith.cmpi sge, %193, %209 : vector<1x256xi32>
    %c7_i32_77 = arith.constant 7 : i32
    %211 = vector.broadcast %c7_i32_77 : i32 to vector<1x256xi32>
    %212 = arith.cmpi slt, %193, %211 : vector<1x256xi32>
    %213 = arith.andi %210, %212 : vector<1x256xi1>
    %214 = arith.andi %208, %198 : vector<1x256xi1>
    %cst_78 = arith.constant 1.000000e+00 : f32
    %215 = vector.broadcast %cst_78 : f32 to vector<1x256xf32>
    %216 = arith.subf %215, %190 : vector<1x256xf32>
    %cst_79 = arith.constant 1.000000e+00 : f32
    %217 = vector.broadcast %cst_79 : f32 to vector<1x256xf32>
    %218 = arith.subf %217, %191 : vector<1x256xf32>
    %219 = arith.mulf %216, %218 : vector<1x256xf32>
    %cst_80 = arith.constant 0.000000e+00 : f32
    %220 = vector.broadcast %cst_80 : f32 to vector<1x256xf32>
    %221 = arith.select %214, %219, %220 : vector<1x256xi1>, vector<1x256xf32>
    %222 = arith.andi %208, %203 : vector<1x256xi1>
    %cst_81 = arith.constant 1.000000e+00 : f32
    %223 = vector.broadcast %cst_81 : f32 to vector<1x256xf32>
    %224 = arith.subf %223, %191 : vector<1x256xf32>
    %225 = arith.mulf %190, %224 : vector<1x256xf32>
    %cst_82 = arith.constant 0.000000e+00 : f32
    %226 = vector.broadcast %cst_82 : f32 to vector<1x256xf32>
    %227 = arith.select %222, %225, %226 : vector<1x256xi1>, vector<1x256xf32>
    %228 = arith.andi %213, %198 : vector<1x256xi1>
    %cst_83 = arith.constant 1.000000e+00 : f32
    %229 = vector.broadcast %cst_83 : f32 to vector<1x256xf32>
    %230 = arith.subf %229, %190 : vector<1x256xf32>
    %231 = arith.mulf %230, %191 : vector<1x256xf32>
    %cst_84 = arith.constant 0.000000e+00 : f32
    %232 = vector.broadcast %cst_84 : f32 to vector<1x256xf32>
    %233 = arith.select %228, %231, %232 : vector<1x256xi1>, vector<1x256xf32>
    %234 = arith.andi %213, %203 : vector<1x256xi1>
    %235 = arith.mulf %190, %191 : vector<1x256xf32>
    %cst_85 = arith.constant 0.000000e+00 : f32
    %236 = vector.broadcast %cst_85 : f32 to vector<1x256xf32>
    %237 = arith.select %234, %235, %236 : vector<1x256xi1>, vector<1x256xf32>
    %c8_i32_86 = arith.constant 8 : i32
    %238 = vector.broadcast %c8_i32_86 : i32 to vector<1x256xi32>
    %239 = arith.muli %193, %238 : vector<1x256xi32>
    %240 = arith.addi %239, %192 : vector<1x256xi32>
    %241 = tpu.iota {dimensions = array<i32: 0>} : vector<64x256xi32>
    %242 = vector.broadcast %240 : vector<1x256xi32> to vector<64x256xi32>
    %243 = arith.subi %241, %242 : vector<64x256xi32>
    %c0_i32_87 = arith.constant 0 : i32
    %244 = vector.broadcast %c0_i32_87 : i32 to vector<64x256xi32>
    %245 = arith.cmpi eq, %243, %244 : vector<64x256xi32>
    %cst_88 = arith.constant 0.000000e+00 : f32
    %246 = vector.shape_cast %221 : vector<1x256xf32> to vector<1x256xf32>
    %247 = vector.broadcast %246 : vector<1x256xf32> to vector<64x256xf32>
    %248 = vector.broadcast %cst_88 : f32 to vector<64x256xf32>
    %249 = arith.select %245, %247, %248 : vector<64x256xi1>, vector<64x256xf32>
    %c1_i32_89 = arith.constant 1 : i32
    %250 = vector.broadcast %c1_i32_89 : i32 to vector<64x256xi32>
    %251 = arith.cmpi eq, %243, %250 : vector<64x256xi32>
    %cst_90 = arith.constant 0.000000e+00 : f32
    %252 = vector.shape_cast %227 : vector<1x256xf32> to vector<1x256xf32>
    %253 = vector.broadcast %252 : vector<1x256xf32> to vector<64x256xf32>
    %254 = vector.broadcast %cst_90 : f32 to vector<64x256xf32>
    %255 = arith.select %251, %253, %254 : vector<64x256xi1>, vector<64x256xf32>
    %256 = arith.addf %249, %255 : vector<64x256xf32>
    %c8_i32_91 = arith.constant 8 : i32
    %257 = vector.broadcast %c8_i32_91 : i32 to vector<64x256xi32>
    %258 = arith.cmpi eq, %243, %257 : vector<64x256xi32>
    %cst_92 = arith.constant 0.000000e+00 : f32
    %259 = vector.shape_cast %233 : vector<1x256xf32> to vector<1x256xf32>
    %260 = vector.broadcast %259 : vector<1x256xf32> to vector<64x256xf32>
    %261 = vector.broadcast %cst_92 : f32 to vector<64x256xf32>
    %262 = arith.select %258, %260, %261 : vector<64x256xi1>, vector<64x256xf32>
    %263 = arith.addf %256, %262 : vector<64x256xf32>
    %c9_i32 = arith.constant 9 : i32
    %264 = vector.broadcast %c9_i32 : i32 to vector<64x256xi32>
    %265 = arith.cmpi eq, %243, %264 : vector<64x256xi32>
    %cst_93 = arith.constant 0.000000e+00 : f32
    %266 = vector.shape_cast %237 : vector<1x256xf32> to vector<1x256xf32>
    %267 = vector.broadcast %266 : vector<1x256xf32> to vector<64x256xf32>
    %268 = vector.broadcast %cst_93 : f32 to vector<64x256xf32>
    %269 = arith.select %265, %267, %268 : vector<64x256xi1>, vector<64x256xf32>
    %270 = arith.addf %263, %269 : vector<64x256xf32>
    %271 = arith.truncf %270 : vector<64x256xf32> to vector<64x256xbf16>
    %cst_94 = arith.constant dense<0.000000e+00> : vector<8x256xf32>
    %272 = tpu.matmul %3, %271, %cst_94 {dimension_numbers = #tpu.dot_dimension_numbers<[1], [0], [0], [1], [0, 0, 1, 1], [], []>} : vector<8x64xbf16>, vector<64x256xbf16>, vector<8x256xf32> -> vector<8x256xf32>
    %273 = arith.addf %272, %30 : vector<8x256xf32>
    %c0_95 = arith.constant 0 : index
    %c0_96 = arith.constant 0 : index
    %c0_97 = arith.constant 0 : index
    %274 = vector.load %arg11[%c0_95, %c0_96, %c0_97] : memref<1x8x256xf32, #tpu.memory_space<vmem>>, vector<1x8x256xf32>
    %275 = vector.shape_cast %274 : vector<1x8x256xf32> to vector<8x256xf32>
    %276 = vector.shape_cast %273 : vector<8x256xf32> to vector<1x8x256xf32>
    tpu.vector_store %arg11[%c0_95, %c0_96, %c0_97], %276 {strides = array<i32>} : memref<1x8x256xf32, #tpu.memory_space<vmem>>, vector<1x8x256xf32>,
    return
  }
  func.func @transform_0(%arg0: i32) -> (i32, i32, i32) {
    %c0_i32 = arith.constant 0 : i32
    %c0_i32_0 = arith.constant 0 : i32
    %c0_i32_1 = arith.constant 0 : i32
    return %arg0, %c0_i32, %c0_i32_0 : i32, i32, i32
  }
  func.func @transform_1(%arg0: i32) -> (i32, i32, i32) {
    %c0_i32 = arith.constant 0 : i32
    %c0_i32_0 = arith.constant 0 : i32
    %c0_i32_1 = arith.constant 0 : i32
    return %arg0, %c0_i32, %c0_i32_0 : i32, i32, i32
  }
  func.func @transform_2(%arg0: i32) -> (i32, i32) {
    %c0_i32 = arith.constant 0 : i32
    %c0_i32_0 = arith.constant 0 : i32
    %c0_i32_1 = arith.constant 0 : i32
    return %c0_i32, %c0_i32_0 : i32, i32
  }
  func.func @transform_3(%arg0: i32) -> (i32, i32) {
    %c0_i32 = arith.constant 0 : i32
    %c0_i32_0 = arith.constant 0 : i32
    %c0_i32_1 = arith.constant 0 : i32
    return %c0_i32, %c0_i32_0 : i32, i32
  }
  func.func @transform_4(%arg0: i32) -> (i32, i32) {
    %c0_i32 = arith.constant 0 : i32
    %c0_i32_0 = arith.constant 0 : i32
    %c0_i32_1 = arith.constant 0 : i32
    return %c0_i32, %c0_i32_0 : i32, i32
  }
  func.func @transform_5(%arg0: i32) -> (i32, i32) {
    %c0_i32 = arith.constant 0 : i32
    %c0_i32_0 = arith.constant 0 : i32
    %c0_i32_1 = arith.constant 0 : i32
    return %c0_i32, %c0_i32_0 : i32, i32
  }
  func.func @transform_6(%arg0: i32) -> (i32, i32) {
    %c0_i32 = arith.constant 0 : i32
    %c0_i32_0 = arith.constant 0 : i32
    %c0_i32_1 = arith.constant 0 : i32
    return %c0_i32, %c0_i32_0 : i32, i32
  }
  func.func @transform_7(%arg0: i32) -> (i32, i32) {
    %c0_i32 = arith.constant 0 : i32
    %c0_i32_0 = arith.constant 0 : i32
    %c0_i32_1 = arith.constant 0 : i32
    return %c0_i32, %c0_i32_0 : i32, i32
  }
  func.func @transform_8(%arg0: i32) -> (i32, i32) {
    %c0_i32 = arith.constant 0 : i32
    %c0_i32_0 = arith.constant 0 : i32
    %c0_i32_1 = arith.constant 0 : i32
    return %c0_i32, %c0_i32_0 : i32, i32
  }
  func.func @transform_9(%arg0: i32) -> (i32, i32) {
    %c0_i32 = arith.constant 0 : i32
    %c0_i32_0 = arith.constant 0 : i32
    %c0_i32_1 = arith.constant 0 : i32
    return %c0_i32, %c0_i32_0 : i32, i32
  }
  func.func @transform_10(%arg0: i32) -> (i32, i32, i32) {
    %c0_i32 = arith.constant 0 : i32
    %c0_i32_0 = arith.constant 0 : i32
    %c0_i32_1 = arith.constant 0 : i32
    return %arg0, %c0_i32, %c0_i32_0 : i32, i32, i32
  }
}

</mosaic_0001>

<llo_original>
// kernel: flow_upsample_forward.1
$region0: #{flow_upsample_forward.1}
  #allocation0 [shape = 'u32[]', space=smem, size = 0x4, offset = 0x4, fixed_abs, tag = 'smem constant byte address 0x4 - core index']
  #allocation1 [shape = 'u32[72,128]{1,0:T(1,128)}', space=vmem, size = 0x9000, scoped, tag = 'internal scratch']
  %s0 = inlined_call_operand.vmem [shape: bf16[2,4,256], index: 0, kind: input, shape index: {}]
  %s1 = inlined_call_operand.vmem [shape: bf16[2,8,64], index: 1, kind: input, shape index: {}]
  %s2 = inlined_call_operand.vmem [shape: bf16[8,4], index: 2, kind: input, shape index: {}]
  %s3 = inlined_call_operand.vmem [shape: bf16[4,8], index: 3, kind: input, shape index: {}]
  %s4 = inlined_call_operand.vmem [shape: bf16[4,8], index: 4, kind: input, shape index: {}]
  %s5 = inlined_call_operand.vmem [shape: bf16[18,4], index: 5, kind: input, shape index: {}]
  %s6 = inlined_call_operand.vmem [shape: bf16[18,4], index: 6, kind: input, shape index: {}]
  %s7 = inlined_call_operand.vmem [shape: f32[8,8], index: 7, kind: input, shape index: {}]
  %s8 = inlined_call_operand.vmem [shape: bf16[64,256], index: 8, kind: input, shape index: {}]
  %s9 = inlined_call_operand.vmem [shape: f32[11,256], index: 9, kind: input, shape index: {}]
  %s10 = inlined_call_operand.vmem [shape: f32[2,8,256], index: 10, kind: output, shape index: {}]
  %s11 = sld [smem:[#allocation0]]
  $region73: #{flow_upsample_forward.1} parent=0
    _
  %s13 = ssub.s32 1, %s11
  %s14 = scalar_select 0, %s13, %s11
  loop: start=0, step=1, limit=4
  $region2: #{flow_upsample_forward.1} parent=0 // loop_pre_header
    _
  $region3: #{flow_upsample_forward.1} parent=0 // loop_header
    %s16 = sphi 0, %s20
    %p17 = scmp.ge.s32.totalorder %s16, 4
    %s26 = sphi 0, %s28
    %s29 = sphi 0, %s26
    %s30 = sphi 0, %s29
    %s46 = sphi 0, %s30
    %s52 = sphi 0, %s54
    %s55 = sphi 0, %s52
    %s56 = sphi 0, %s55
    %s72 = sphi 0, %s56
    %s76 = sphi 0, %s76
    %s78 = sphi 0, %s76
    %s79 = sphi 0, %s78
    %s93 = sphi 0, %s79
    %s97 = sphi 0, %s97
    %s99 = sphi 0, %s97
    %s100 = sphi 0, %s99
    %s114 = sphi 0, %s100
    %s118 = sphi 0, %s118
    %s120 = sphi 0, %s118
    %s121 = sphi 0, %s120
    %s135 = sphi 0, %s121
    %s139 = sphi 0, %s139
    %s141 = sphi 0, %s139
    %s142 = sphi 0, %s141
    %s156 = sphi 0, %s142
    %s160 = sphi 0, %s160
    %s162 = sphi 0, %s160
    %s163 = sphi 0, %s162
    %s177 = sphi 0, %s163
    %s181 = sphi 0, %s181
    %s183 = sphi 0, %s181
    %s184 = sphi 0, %s183
    %s198 = sphi 0, %s184
    %s202 = sphi 0, %s202
    %s204 = sphi 0, %s202
    %s205 = sphi 0, %s204
    %s219 = sphi 0, %s205
    %s223 = sphi 0, %s223
    %s225 = sphi 0, %s223
    %s226 = sphi 0, %s225
    %s240 = sphi 0, %s226
    %s246 = sphi 0, %s248
    %s249 = sphi 0, %s246
    %s250 = sphi 0, %s249
    %s266 = sphi 0, %s250
  $region4: #{flow_upsample_forward.1} parent=0 // loop_header_branch
    %19 = sbr.rel (%p17) target = $region8
  $region5: #{flow_upsample_forward.1} parent=0 // loop_body
    %s21 = ssub.s32 %s16, 1
    %s22 = ssub.s32 %s16, 2
    %s23 = sadd.s32 %s16, 1
    %s24 = ssub.s32 %s16, %s23
    %p25 = scmp.eq.s32.totalorder %s24, 0
    %s27 = sadd.s32 %s26, 1
    %s28 = scalar_select %p25, %s26, %s27
    %p31 = pneg %p25
    %p32 = scmp.eq.s32.totalorder %s16, 1
    %p33 = por %p31, %p32
    %p34 = scmp.ne.s32.totalorder %s26, %s29
    %p35 = scmp.eq.s32.totalorder %s16, 0
    %p36 = por %p34, %p35
    %p37 = scmp.ne.s32.totalorder %s26, %s29
    %p38 = scmp.eq.s32.totalorder %s21, 1
    %p39 = por %p37, %p38
    %p40 = scmp.ne.s32.totalorder %s29, %s30
    %p41 = scmp.eq.s32.totalorder %s21, 0
    %p42 = por %p40, %p41
    %p43 = scmp.ne.s32.totalorder %s29, %s30
    %p44 = scmp.eq.s32.totalorder %s22, 1
    %p45 = por %p43, %p44
    %p47 = scmp.ne.s32.totalorder %s30, %s46
    %p48 = scmp.eq.s32.totalorder %s22, 0
    %p49 = por %p47, %p48
    %s50 = ssub.s32 %s16, %s23
    %p51 = scmp.eq.s32.totalorder %s50, 0
    %s53 = sadd.s32 %s52, 1
    %s54 = scalar_select %p51, %s52, %s53
    %p57 = pneg %p51
    %p58 = scmp.eq.s32.totalorder %s16, 1
    %p59 = por %p57, %p58
    %p60 = scmp.ne.s32.totalorder %s52, %s55
    %p61 = scmp.eq.s32.totalorder %s16, 0
    %p62 = por %p60, %p61
    %p63 = scmp.ne.s32.totalorder %s52, %s55
    %p64 = scmp.eq.s32.totalorder %s21, 1
    %p65 = por %p63, %p64
    %p66 = scmp.ne.s32.totalorder %s55, %s56
    %p67 = scmp.eq.s32.totalorder %s21, 0
    %p68 = por %p66, %p67
    %p69 = scmp.ne.s32.totalorder %s55, %s56
    %p70 = scmp.eq.s32.totalorder %s22, 1
    %p71 = por %p69, %p70
    %p73 = scmp.ne.s32.totalorder %s56, %s72
    %p74 = scmp.eq.s32.totalorder %s22, 0
    %p75 = por %p73, %p74
    %s77 = sadd.s32 %s76, 1
    %p80 = scmp.eq.s32.totalorder %s16, 1
    %p81 = scmp.ne.s32.totalorder %s76, %s78
    %p82 = scmp.eq.s32.totalorder %s16, 0
    %p83 = por %p81, %p82
    %p84 = scmp.ne.s32.totalorder %s76, %s78
    %p85 = scmp.eq.s32.totalorder %s21, 1
    %p86 = por %p84, %p85
    %p87 = scmp.ne.s32.totalorder %s78, %s79
    %p88 = scmp.eq.s32.totalorder %s21, 0
    %p89 = por %p87, %p88
    %p90 = scmp.ne.s32.totalorder %s78, %s79
    %p91 = scmp.eq.s32.totalorder %s22, 1
    %p92 = por %p90, %p91
    %p94 = scmp.ne.s32.totalorder %s79, %s93
    %p95 = scmp.eq.s32.totalorder %s22, 0
    %p96 = por %p94, %p95
    %s98 = sadd.s32 %s97, 1
    %p101 = scmp.eq.s32.totalorder %s16, 1
    %p102 = scmp.ne.s32.totalorder %s97, %s99
    %p103 = scmp.eq.s32.totalorder %s16, 0
    %p104 = por %p102, %p103
    %p105 = scmp.ne.s32.totalorder %s97, %s99
    %p106 = scmp.eq.s32.totalorder %s21, 1
    %p107 = por %p105, %p106
    %p108 = scmp.ne.s32.totalorder %s99, %s100
    %p109 = scmp.eq.s32.totalorder %s21, 0
    %p110 = por %p108, %p109
    %p111 = scmp.ne.s32.totalorder %s99, %s100
    %p112 = scmp.eq.s32.totalorder %s22, 1
    %p113 = por %p111, %p112
    %p115 = scmp.ne.s32.totalorder %s100, %s114
    %p116 = scmp.eq.s32.totalorder %s22, 0
    %p117 = por %p115, %p116
    %s119 = sadd.s32 %s118, 1
    %p122 = scmp.eq.s32.totalorder %s16, 1
    %p123 = scmp.ne.s32.totalorder %s118, %s120
    %p124 = scmp.eq.s32.totalorder %s16, 0
    %p125 = por %p123, %p124
    %p126 = scmp.ne.s32.totalorder %s118, %s120
    %p127 = scmp.eq.s32.totalorder %s21, 1
    %p128 = por %p126, %p127
    %p129 = scmp.ne.s32.totalorder %s120, %s121
    %p130 = scmp.eq.s32.totalorder %s21, 0
    %p131 = por %p129, %p130
    %p132 = scmp.ne.s32.totalorder %s120, %s121
    %p133 = scmp.eq.s32.totalorder %s22, 1
    %p134 = por %p132, %p133
    %p136 = scmp.ne.s32.totalorder %s121, %s135
    %p137 = scmp.eq.s32.totalorder %s22, 0
    %p138 = por %p136, %p137
    %s140 = sadd.s32 %s139, 1
    %p143 = scmp.eq.s32.totalorder %s16, 1
    %p144 = scmp.ne.s32.totalorder %s139, %s141
    %p145 = scmp.eq.s32.totalorder %s16, 0
    %p146 = por %p144, %p145
    %p147 = scmp.ne.s32.totalorder %s139, %s141
    %p148 = scmp.eq.s32.totalorder %s21, 1
    %p149 = por %p147, %p148
    %p150 = scmp.ne.s32.totalorder %s141, %s142
    %p151 = scmp.eq.s32.totalorder %s21, 0
    %p152 = por %p150, %p151
    %p153 = scmp.ne.s32.totalorder %s141, %s142
    %p154 = scmp.eq.s32.totalorder %s22, 1
    %p155 = por %p153, %p154
    %p157 = scmp.ne.s32.totalorder %s142, %s156
    %p158 = scmp.eq.s32.totalorder %s22, 0
    %p159 = por %p157, %p158
    %s161 = sadd.s32 %s160, 1
    %p164 = scmp.eq.s32.totalorder %s16, 1
    %p165 = scmp.ne.s32.totalorder %s160, %s162
    %p166 = scmp.eq.s32.totalorder %s16, 0
    %p167 = por %p165, %p166
    %p168 = scmp.ne.s32.totalorder %s160, %s162
    %p169 = scmp.eq.s32.totalorder %s21, 1
    %p170 = por %p168, %p169
    %p171 = scmp.ne.s32.totalorder %s162, %s163
    %p172 = scmp.eq.s32.totalorder %s21, 0
    %p173 = por %p171, %p172
    %p174 = scmp.ne.s32.totalorder %s162, %s163
    %p175 = scmp.eq.s32.totalorder %s22, 1
    %p176 = por %p174, %p175
    %p178 = scmp.ne.s32.totalorder %s163, %s177
    %p179 = scmp.eq.s32.totalorder %s22, 0
    %p180 = por %p178, %p179
    %s182 = sadd.s32 %s181, 1
    %p185 = scmp.eq.s32.totalorder %s16, 1
    %p186 = scmp.ne.s32.totalorder %s181, %s183
    %p187 = scmp.eq.s32.totalorder %s16, 0
    %p188 = por %p186, %p187
    %p189 = scmp.ne.s32.totalorder %s181, %s183
    %p190 = scmp.eq.s32.totalorder %s21, 1
    %p191 = por %p189, %p190
    %p192 = scmp.ne.s32.totalorder %s183, %s184
    %p193 = scmp.eq.s32.totalorder %s21, 0
    %p194 = por %p192, %p193
    %p195 = scmp.ne.s32.totalorder %s183, %s184
    %p196 = scmp.eq.s32.totalorder %s22, 1
    %p197 = por %p195, %p196
    %p199 = scmp.ne.s32.totalorder %s184, %s198
    %p200 = scmp.eq.s32.totalorder %s22, 0
    %p201 = por %p199, %p200
    %s203 = sadd.s32 %s202, 1
    %p206 = scmp.eq.s32.totalorder %s16, 1
    %p207 = scmp.ne.s32.totalorder %s202, %s204
    %p208 = scmp.eq.s32.totalorder %s16, 0
    %p209 = por %p207, %p208
    %p210 = scmp.ne.s32.totalorder %s202, %s204
    %p211 = scmp.eq.s32.totalorder %s21, 1
    %p212 = por %p210, %p211
    %p213 = scmp.ne.s32.totalorder %s204, %s205
    %p214 = scmp.eq.s32.totalorder %s21, 0
    %p215 = por %p213, %p214
    %p216 = scmp.ne.s32.totalorder %s204, %s205
    %p217 = scmp.eq.s32.totalorder %s22, 1
    %p218 = por %p216, %p217
    %p220 = scmp.ne.s32.totalorder %s205, %s219
    %p221 = scmp.eq.s32.totalorder %s22, 0
    %p222 = por %p220, %p221
    %s224 = sadd.s32 %s223, 1
    %p227 = scmp.eq.s32.totalorder %s16, 1
    %p228 = scmp.ne.s32.totalorder %s223, %s225
    %p229 = scmp.eq.s32.totalorder %s16, 0
    %p230 = por %p228, %p229
    %p231 = scmp.ne.s32.totalorder %s223, %s225
    %p232 = scmp.eq.s32.totalorder %s21, 1
    %p233 = por %p231, %p232
    %p234 = scmp.ne.s32.totalorder %s225, %s226
    %p235 = scmp.eq.s32.totalorder %s21, 0
    %p236 = por %p234, %p235
    %p237 = scmp.ne.s32.totalorder %s225, %s226
    %p238 = scmp.eq.s32.totalorder %s22, 1
    %p239 = por %p237, %p238
    %p241 = scmp.ne.s32.totalorder %s226, %s240
    %p242 = scmp.eq.s32.totalorder %s22, 0
    %p243 = por %p241, %p242
    %s244 = ssub.s32 %s16, %s23
    %p245 = scmp.eq.s32.totalorder %s244, 0
    %s247 = sadd.s32 %s246, 1
    %s248 = scalar_select %p245, %s246, %s247
    %p251 = pneg %p245
    %p252 = scmp.eq.s32.totalorder %s16, 1
    %p253 = por %p251, %p252
    %p254 = scmp.ne.s32.totalorder %s246, %s249
    %p255 = scmp.eq.s32.totalorder %s16, 0
    %p256 = por %p254, %p255
    %p257 = scmp.ne.s32.totalorder %s246, %s249
    %p258 = scmp.eq.s32.totalorder %s21, 1
    %p259 = por %p257, %p258
    %p260 = scmp.ne.s32.totalorder %s249, %s250
    %p261 = scmp.eq.s32.totalorder %s21, 0
    %p262 = por %p260, %p261
    %p263 = scmp.ne.s32.totalorder %s249, %s250
    %p264 = scmp.eq.s32.totalorder %s22, 1
    %p265 = por %p263, %p264
    %p267 = scmp.ne.s32.totalorder %s250, %s266
    %p268 = scmp.eq.s32.totalorder %s22, 0
    %p269 = por %p267, %p268
    %p270 = scmp.le.s32.totalorder 1, %s16
    %p271 = scmp.lt.s32.totalorder %s16, 3
    %p272 = pnand %p270, %p271
    %p273 = pneg %p272
    // Predicated region
    $region9: #{flow_upsample_forward.1} parent=5 // pred_check
      _
    $region10: #{flow_upsample_forward.1} parent=5 // pred_check_branch
      %275 = sbr.rel (%p272) target = $region12
    $region11: #{flow_upsample_forward.1} parent=5 // pred_region
      %s276 = ssub.s32 %s16, 1
      // Predicated region
      $region13: #{flow_upsample_forward.1} parent=11 // pred_check
        %p277 = pneg %p89
      $region14: #{flow_upsample_forward.1} parent=11 // pred_check_branch
        %279 = sbr.rel (%p277) target = $region16
      $region15: #{flow_upsample_forward.1} parent=11 // pred_region
        _
      $region16: #{flow_upsample_forward.1} parent=11 // pred_fallthru
        _
      // Predicated region
      $region17: #{flow_upsample_forward.1} parent=11 // pred_check
        %p280 = pneg %p110
      $region18: #{flow_upsample_forward.1} parent=11 // pred_check_branch
        %282 = sbr.rel (%p280) target = $region20
      $region19: #{flow_upsample_forward.1} parent=11 // pred_region
        _
      $region20: #{flow_upsample_forward.1} parent=11 // pred_fallthru
        _
      // Predicated region
      $region21: #{flow_upsample_forward.1} parent=11 // pred_check
        %p283 = pneg %p131
      $region22: #{flow_upsample_forward.1} parent=11 // pred_check_branch
        %285 = sbr.rel (%p283) target = $region24
      $region23: #{flow_upsample_forward.1} parent=11 // pred_region
        _
      $region24: #{flow_upsample_forward.1} parent=11 // pred_fallthru
        _
      // Predicated region
      $region25: #{flow_upsample_forward.1} parent=11 // pred_check
        %p286 = pneg %p152
      $region26: #{flow_upsample_forward.1} parent=11 // pred_check_branch
        %288 = sbr.rel (%p286) target = $region28
      $region27: #{flow_upsample_forward.1} parent=11 // pred_region
        _
      $region28: #{flow_upsample_forward.1} parent=11 // pred_fallthru
        _
      // Predicated region
      $region29: #{flow_upsample_forward.1} parent=11 // pred_check
        %p289 = pneg %p173
      $region30: #{flow_upsample_forward.1} parent=11 // pred_check_branch
        %291 = sbr.rel (%p289) target = $region32
      $region31: #{flow_upsample_forward.1} parent=11 // pred_region
        _
      $region32: #{flow_upsample_forward.1} parent=11 // pred_fallthru
        _
      // Predicated region
      $region33: #{flow_upsample_forward.1} parent=11 // pred_check
        %p292 = pneg %p194
      $region34: #{flow_upsample_forward.1} parent=11 // pred_check_branch
        %294 = sbr.rel (%p292) target = $region36
      $region35: #{flow_upsample_forward.1} parent=11 // pred_region
        _
      $region36: #{flow_upsample_forward.1} parent=11 // pred_fallthru
        _
      // Predicated region
      $region37: #{flow_upsample_forward.1} parent=11 // pred_check
        %p295 = pneg %p215
      $region38: #{flow_upsample_forward.1} parent=11 // pred_check_branch
        %297 = sbr.rel (%p295) target = $region40
      $region39: #{flow_upsample_forward.1} parent=11 // pred_region
        _
      $region40: #{flow_upsample_forward.1} parent=11 // pred_fallthru
        _
      // Predicated region
      $region41: #{flow_upsample_forward.1} parent=11 // pred_check
        %p298 = pneg %p236
      $region42: #{flow_upsample_forward.1} parent=11 // pred_check_branch
        %300 = sbr.rel (%p298) target = $region44
      $region43: #{flow_upsample_forward.1} parent=11 // pred_region
        _
      $region44: #{flow_upsample_forward.1} parent=11 // pred_fallthru
        _
    $region12: #{flow_upsample_forward.1} parent=5 // pred_fallthru
      _
    %p301 = scmp.lt.s32.totalorder %s16, 2
    // Predicated region
    $region45: #{flow_upsample_forward.1} parent=5 // pred_check
      %p302 = pneg %p301
    $region46: #{flow_upsample_forward.1} parent=5 // pred_check_branch
      %304 = sbr.rel (%p302) target = $region48
    $region47: #{flow_upsample_forward.1} parent=5 // pred_region
      // Predicated region
      $region49: #{flow_upsample_forward.1} parent=47 // pred_check
        %p305 = pneg %p36
      $region50: #{flow_upsample_forward.1} parent=47 // pred_check_branch
        %307 = sbr.rel (%p305) target = $region52
      $region51: #{flow_upsample_forward.1} parent=47 // pred_region
        %p308 = scmp.lt.s32.totalorder %s16, 1
        %s309 = scalar_select %p308, %s16, 1
        %s310 = smul.addr %s309, 2
        %s311 = smul.addr %s310, 2
        %s312 = scalar_lea.vmem %s0, %s311
      $region52: #{flow_upsample_forward.1} parent=47 // pred_fallthru
        _
      // Predicated region
      $region53: #{flow_upsample_forward.1} parent=47 // pred_check
        %p313 = pneg %p62
      $region54: #{flow_upsample_forward.1} parent=47 // pred_check_branch
        %315 = sbr.rel (%p313) target = $region56
      $region55: #{flow_upsample_forward.1} parent=47 // pred_region
        %p316 = scmp.lt.s32.totalorder %s16, 1
        %s317 = scalar_select %p316, %s16, 1
        %s318 = smul.addr %s317, 4
        %s319 = scalar_lea.vmem %s1, %s318
      $region56: #{flow_upsample_forward.1} parent=47 // pred_fallthru
        _
    $region48: #{flow_upsample_forward.1} parent=5 // pred_fallthru
      _
    %p320 = scmp.le.s32.totalorder 1, %s16
    %p321 = scmp.lt.s32.totalorder %s16, 3
    %p322 = pnand %p320, %p321
    %p323 = pneg %p322
    // Predicated region
    $region57: #{flow_upsample_forward.1} parent=5 // pred_check
      _
    $region58: #{flow_upsample_forward.1} parent=5 // pred_check_branch
      %325 = sbr.rel (%p322) target = $region60
    $region59: #{flow_upsample_forward.1} parent=5 // pred_region
      %s326 = ssub.s32 %s16, 1
      %p327 = scmp.lt.s32.totalorder %s21, 1
      %s328 = scalar_select %p327, %s21, 1
      %s329 = smul.addr %s328, 2
      %s330 = smul.addr %s329, 2
      %s331 = scalar_lea.vmem %s0, %s330
      %p332 = pneg %p42
      %p333 = pneg %p39
      %p334 = scmp.lt.s32.totalorder %s21, 1
      %s335 = scalar_select %p334, %s21, 1
      %s336 = smul.addr %s335, 4
      %s337 = scalar_lea.vmem %s1, %s336
      %p338 = pneg %p68
      %p339 = pneg %p65
      %p340 = pneg %p89
      %p341 = pneg %p86
      %p342 = pneg %p110
      %p343 = pneg %p107
      %p344 = pneg %p131
      %p345 = pneg %p128
      %p346 = pneg %p152
      %p347 = pneg %p149
      %p348 = pneg %p173
      %p349 = pneg %p170
      %p350 = pneg %p194
      %p351 = pneg %p191
      %p352 = pneg %p215
      %p353 = pneg %p212
      %p354 = pneg %p236
      %p355 = pneg %p233
      %p356 = pneg %p262
      %p357 = pneg %p259
      %p358 = scmp.lt.s32.totalorder %s21, 1
      %s359 = scalar_select %p358, %s21, 1
      %s360 = smul.addr %s359, 2
      %s361 = smul.addr %s360, 8
      %s362 = scalar_lea.vmem %s10, %s361
      %p363 = scmp.lt.s32.totalorder %s21, 1
      %s364 = scalar_select %p363, %s21, 1
      %s365 = smul.addr %s364, 2
      %s366 = smul.addr %s365, 2
      %s367 = scalar_lea.vmem %s0, %s366
      %p368 = scmp.lt.s32.totalorder %s21, 1
      %s369 = scalar_select %p368, %s21, 1
      %s370 = smul.addr %s369, 4
      %s371 = scalar_lea.vmem %s1, %s370
      %p372 = scmp.lt.s32.totalorder %s21, 1
      %s373 = scalar_select %p372, %s21, 1
      %s374 = smul.addr %s373, 2
      %s375 = smul.addr %s374, 8
      %s376 = scalar_lea.vmem %s10, %s375
      %v378 = vld [vmem:[%s367] sm:$0xf]
      %v379 = vld [vmem:[%s371] sm:$0xf]
      %v380 = vld [vmem:[%s2] sm:$0xf]
      %382 = vst [vmem:[#allocation1] ss:$4 sm:$0xff] %v378
      %v383 = vld.sshfl [vmem:[#allocation1] sm:$0xff pattern:$0x73625140]
      %v384 = vld.sshfl [vmem:[#allocation1 + $0x8] sm:$0xff pattern:$0x73625140]
      %vm385 = vcmask 31744
      %v387 = vsel %vm385, %v380, 0
      %vm389 = vcmask 1041408
      %v390 = vsel %vm389, %v383, 0
      %v392 = vsel %vm389, %v384, 0
      %394 = vmatpush.bf16.msra.mxu0 0
      %395 = vmatpush.bf16.msra.mxu0 0
      %396 = vmatpush.bf16.msra.mxu0 0
      %397 = vmatpush.bf16.msra.mxu0 0
      %398 = vmatpush.bf16.msra.mxu0 0
      %399 = vmatpush.bf16.msra.mxu0 0
      %400 = vmatpush.bf16.msra.mxu0 0
      %401 = vmatpush.bf16.msra.mxu0 %v390
      %402 = vmatmul.bf16.gmra.mxu0 %v387
      %v403 = vpop.f32.mrf.mxu0
      %v404 = vadd.f32 0.0, %v403
      %v405 = vpop.f32.mrf.mxu0
      %406 = vdwg.mxu0
      %407 = vmatpush.bf16.msra.mxu0 0
      %408 = vmatpush.bf16.msra.mxu0 0
      %409 = vmatpush.bf16.msra.mxu0 0
      %410 = vmatpush.bf16.msra.mxu0 0
      %411 = vmatpush.bf16.msra.mxu0 0
      %412 = vmatpush.bf16.msra.mxu0 0
      %413 = vmatpush.bf16.msra.mxu0 0
      %414 = vmatpush.bf16.msra.mxu0 %v392
      %415 = vmatmul.bf16.gmra.mxu0 %v387
      %v416 = vpop.f32.mrf.mxu0
      %v417 = vadd.f32 0.0, %v416
      %v418 = vpop.f32.mrf.mxu0
      %419 = vdwg.mxu0
      %v420 = vadd.f32 %v404, %v417
      %421 = vadd.xlane.f32.xlu0 %v420
      %v422 = vpop.xlane.xlu0 %421
      %v423 = vrcp.pop 256.0
      %v424 = vmul.f32 256.0, %v423
      %v425 = vsub.f32 1.0, %v424
      %v426 = vmul.f32 %v423, %v425
      %v427 = vadd.f32 %v423, %v426
      %vm428 = vweird.f32 %v423
      %v429 = vsel %vm428, %v423, %v427
      %v430 = vmul.f32 %v422, %v429
      %v431 = vmul.f32 %v404, %v404
      %v432 = vmul.f32 %v417, %v417
      %v433 = vadd.f32 %v431, %v432
      %434 = vadd.xlane.f32.xlu0 %v433
      %v435 = vpop.xlane.xlu0 %434
      %v436 = vmul.f32 %v435, %v429
      %v437 = vmul.f32 %v430, %v430
      %v438 = vsub.f32 %v436, %v437
      %v439 = vld [vmem:[%s7] sm:$0xff]
      %v440 = vsub.f32 %v404, %v430
      %v441 = vsub.f32 %v417, %v430
      %v442 = vadd.f32 %v438, 1e-05
      %v443 = vrsqrt.pop %v442
      %v444 = vmul.f32 %v443, %v442
      %v445 = vmul.f32 %v444, %v443
      %v446 = vmul.f32 0.5, %v445
      %v447 = vsub.f32 1.5, %v446
      %v448 = vmul.f32 %v443, %v447
      %vm449 = vweird.f32 %v442
      %vm450 = vweird.f32 %v443
      %vm451 = vmor %vm449, %vm450
      %v452 = vsel %vm451, %v443, %v448
      %v453 = vmul.f32 %v440, %v452
      %v454 = vmul.f32 %v441, %v452
      %456 = vset.pattern.permute.xlu0 0
      %457 = vperm.xlu0 %456, %v439
      %v458 = vpop.permute.xlu0 %457
      %v460 = vmul.f32 %v453, %v458
      %v461 = vmul.f32 %v454, %v458
      %462 = vset.pattern.permute.xlu0 1
      %463 = vperm.xlu0 %462, %v439
      %v464 = vpop.permute.xlu0 %463
      %v466 = vadd.f32 %v460, %v464
      %v467 = vadd.f32 %v461, %v464
      %v468 = vtanh.pop %v466
      %v469 = vtanh.pop %v467
      %v470 = vld [vmem:[%s3] sm:$0x3]
      %v471 = vpack.c.bf16 %v468, %v468
      %v472 = vpack.c.bf16 %v469, %v469
      %vm473 = vcmask 64512
      %v475 = vsel %vm473, %v470, 0
      %vm477 = vcmask 1043456
      %v479 = vsel %vm477, %v471, 0
      %v482 = vsel %vm477, %v472, 0
      %484 = vmatpush.bf16.msra.mxu0 0
      %485 = vmatpush.bf16.msra.mxu0 0
      %486 = vmatpush.bf16.msra.mxu0 0
      %487 = vmatpush.bf16.msra.mxu0 0
      %488 = vmatpush.bf16.msra.mxu0 0
      %489 = vmatpush.bf16.msra.mxu0 0
      %490 = vmatpush.bf16.msra.mxu0 0
      %491 = vmatpush.bf16.msra.mxu0 %v479
      %492 = vmatmul.bf16.gmra.mxu0 %v475
      %v493 = vpop.f32.mrf.mxu0
      %v494 = vadd.f32 0.0, %v493
      %v495 = vpop.f32.mrf.mxu0
      %496 = vdwg.mxu0
      %497 = vmatpush.bf16.msra.mxu0 0
      %498 = vmatpush.bf16.msra.mxu0 0
      %499 = vmatpush.bf16.msra.mxu0 0
      %500 = vmatpush.bf16.msra.mxu0 0
      %501 = vmatpush.bf16.msra.mxu0 0
      %502 = vmatpush.bf16.msra.mxu0 0
      %503 = vmatpush.bf16.msra.mxu0 0
      %504 = vmatpush.bf16.msra.mxu0 %v482
      %505 = vmatmul.bf16.gmra.mxu0 %v475
      %v506 = vpop.f32.mrf.mxu0
      %v507 = vadd.f32 0.0, %v506
      %v508 = vpop.f32.mrf.mxu0
      %509 = vdwg.mxu0
      %v510 = vsel %vm477, %v494, 0.0
      %v511 = vsel %vm477, %v507, 0.0
      %v512 = vadd.f32 %v510, %v511
      %513 = vadd.xlane.f32.xlu0 %v512
      %v514 = vpop.xlane.xlu0 %513
      %v515 = vmul.f32 %v514, %v429
      %v516 = vmul.f32 %v494, %v494
      %v517 = vmul.f32 %v507, %v507
      %v518 = vsel %vm477, %v516, 0.0
      %v519 = vsel %vm477, %v517, 0.0
      %v520 = vadd.f32 %v518, %v519
      %521 = vadd.xlane.f32.xlu0 %v520
      %v522 = vpop.xlane.xlu0 %521
      %v523 = vmul.f32 %v522, %v429
      %v524 = vmul.f32 %v515, %v515
      %v525 = vsub.f32 %v523, %v524
      %v526 = vld [vmem:[%s7] sm:$0xf]
      %v527 = vsub.f32 %v494, %v515
      %v528 = vsub.f32 %v507, %v515
      %v529 = vadd.f32 %v525, 1e-05
      %v530 = vrsqrt.pop %v529
      %v531 = vmul.f32 %v530, %v529
      %v532 = vmul.f32 %v531, %v530
      %v533 = vmul.f32 0.5, %v532
      %v534 = vsub.f32 1.5, %v533
      %v535 = vmul.f32 %v530, %v534
      %vm536 = vweird.f32 %v529
      %vm537 = vweird.f32 %v530
      %vm538 = vmor %vm536, %vm537
      %v539 = vsel %vm538, %v530, %v535
      %v540 = vmul.f32 %v527, %v539
      %v541 = vmul.f32 %v528, %v539
      %543 = vset.pattern.permute.xlu0 2
      %544 = vperm.xlu0 %543, %v526
      %v545 = vpop.permute.xlu0 %544
      %v547 = vmul.f32 %v540, %v545
      %v548 = vmul.f32 %v541, %v545
      %549 = vset.pattern.permute.xlu0 3
      %550 = vperm.xlu0 %549, %v526
      %v551 = vpop.permute.xlu0 %550
      %v553 = vadd.f32 %v547, %v551
      %v554 = vadd.f32 %v548, %v551
      %v555 = vtanh.pop %v553
      %v556 = vtanh.pop %v554
      %v557 = vld [vmem:[%s4] sm:$0x3]
      %v559 = vsel %vm473, %v557, 0
      %v562 = vsel %vm477, %v379, 0
      %564 = vmatpush.bf16.msra.mxu0 0
      %565 = vmatpush.bf16.msra.mxu0 0
      %566 = vmatpush.bf16.msra.mxu0 0
      %567 = vmatpush.bf16.msra.mxu0 0
      %568 = vmatpush.bf16.msra.mxu0 0
      %569 = vmatpush.bf16.msra.mxu0 0
      %570 = vmatpush.bf16.msra.mxu0 0
      %571 = vmatpush.bf16.msra.mxu0 %v562
      %572 = vmatmul.bf16.gmra.mxu0 %v559
      %v573 = vpop.f32.mrf.mxu0
      %v574 = vadd.f32 0.0, %v573
      %v575 = vpop.f32.mrf.mxu0
      %576 = vdwg.mxu0
      %vm577 = vcmask 519168
      %v578 = vsel %vm577, %v574, 0.0
      %579 = vadd.xlane.f32.xlu0 %v578
      %v580 = vpop.xlane.xlu0 %579
      %v581 = vrcp.pop 64.0
      %v582 = vmul.f32 64.0, %v581
      %v583 = vsub.f32 1.0, %v582
      %v584 = vmul.f32 %v581, %v583
      %v585 = vadd.f32 %v581, %v584
      %vm586 = vweird.f32 %v581
      %v587 = vsel %vm586, %v581, %v585
      %v588 = vmul.f32 %v580, %v587
      %v589 = vmul.f32 %v574, %v574
      %v590 = vsel %vm577, %v589, 0.0
      %591 = vadd.xlane.f32.xlu0 %v590
      %v592 = vpop.xlane.xlu0 %591
      %v593 = vmul.f32 %v592, %v587
      %v594 = vmul.f32 %v588, %v588
      %v595 = vsub.f32 %v593, %v594
      %v596 = vsub.f32 %v574, %v588
      %v597 = vadd.f32 %v595, 1e-05
      %v598 = vrsqrt.pop %v597
      %v599 = vmul.f32 %v598, %v597
      %v600 = vmul.f32 %v599, %v598
      %v601 = vmul.f32 0.5, %v600
      %v602 = vsub.f32 1.5, %v601
      %v603 = vmul.f32 %v598, %v602
      %vm604 = vweird.f32 %v597
      %vm605 = vweird.f32 %v598
      %vm606 = vmor %vm604, %vm605
      %v607 = vsel %vm606, %v598, %v603
      %v608 = vmul.f32 %v596, %v607
      %609 = vset.pattern.permute.xlu0 4
      %610 = vperm.xlu0 %609, %v526
      %v611 = vpop.permute.xlu0 %610
      %v613 = vmul.f32 %v608, %v611
      %614 = vset.pattern.permute.xlu0 5
      %615 = vperm.xlu0 %614, %v526
      %v616 = vpop.permute.xlu0 %615
      %v618 = vadd.f32 %v613, %v616
      %v619 = vtanh.pop %v618
      %v620 = vpack.c.bf16 %v619, %v619
      %v621 = vld [vmem:[%s8] sm:$0xff]
      %v622 = vld [vmem:[%s8 + $0x8] sm:$0xff]
      %v623 = vld [vmem:[%s8 + $0x10] sm:$0xff]
      %v624 = vld [vmem:[%s8 + $0x18] sm:$0xff]
      %v625 = vld [vmem:[%s8 + $0x20] sm:$0xff]
      %v626 = vld [vmem:[%s8 + $0x28] sm:$0xff]
      %v627 = vld [vmem:[%s8 + $0x30] sm:$0xff]
      %v628 = vld [vmem:[%s8 + $0x38] sm:$0xff]
      %v637 = vunpack.c.l.b16 %v621
      %v638 = vunpack.c.h.b16 %v621
      %v639 = vunpack.c.l.b16 %v622
      %v640 = vunpack.c.h.b16 %v622
      %v641 = vunpack.c.l.b16 %v623
      %v642 = vunpack.c.h.b16 %v623
      %v643 = vunpack.c.l.b16 %v624
      %v644 = vunpack.c.h.b16 %v624
      %v645 = vunpack.c.l.b16 %v625
      %v646 = vunpack.c.h.b16 %v625
      %v647 = vunpack.c.l.b16 %v626
      %v648 = vunpack.c.h.b16 %v626
      %v649 = vunpack.c.l.b16 %v627
      %v650 = vunpack.c.h.b16 %v627
      %v651 = vunpack.c.l.b16 %v628
      %v652 = vunpack.c.h.b16 %v628
      %v653 = vpack.c.b16 %v639, %v637
      %v654 = vpack.c.b16 %v640, %v638
      %v655 = vpack.c.b16 %v643, %v641
      %v656 = vpack.c.b16 %v644, %v642
      %v657 = vpack.c.b16 %v647, %v645
      %v658 = vpack.c.b16 %v648, %v646
      %v659 = vpack.c.b16 %v651, %v649
      %v660 = vpack.c.b16 %v652, %v650
      %vm669 = vcmask 523264
      %v671 = vsel %vm669, %v620, 0
      %673 = vmatpush.bf16.msra.mxu0 0
      %674 = vmatpush.bf16.msra.mxu0 0
      %675 = vmatpush.bf16.msra.mxu0 0
      %676 = vmatpush.bf16.msra.mxu0 0
      %677 = vmatpush.bf16.msra.mxu0 %v659
      %678 = vmatpush.bf16.msra.mxu0 %v657
      %679 = vmatpush.bf16.msra.mxu0 %v655
      %680 = vmatpush.bf16.msra.mxu0 %v653
      %681 = vmatmul.bf16.gmra.mxu0 %v671
      %v682 = vpop.f32.mrf.mxu0
      %v683 = vadd.f32 0.0, %v682
      %v684 = vpop.f32.mrf.mxu0
      %685 = vdwg.mxu0
      %686 = vmatpush.bf16.msra.mxu0 0
      %687 = vmatpush.bf16.msra.mxu0 0
      %688 = vmatpush.bf16.msra.mxu0 0
      %689 = vmatpush.bf16.msra.mxu0 0
      %690 = vmatpush.bf16.msra.mxu0 %v660
      %691 = vmatpush.bf16.msra.mxu0 %v658
      %692 = vmatpush.bf16.msra.mxu0 %v656
      %693 = vmatpush.bf16.msra.mxu0 %v654
      %694 = vmatmul.bf16.gmra.mxu0 %v671
      %v695 = vpop.f32.mrf.mxu0
      %v696 = vadd.f32 0.0, %v695
      %v697 = vpop.f32.mrf.mxu0
      %698 = vdwg.mxu0
      %v699 = vld [vmem:[%s5] sm:$0xf]
      %v700 = vld [vmem:[%s5 + $0x4] sm:$0xf]
      %v701 = vld [vmem:[%s5 + $0x8] sm:$0x1]
      %v702 = vpack.c.bf16 %v555, %v555
      %v703 = vpack.c.bf16 %v556, %v556
      %v704 = vld [vmem:[%s6] sm:$0xf]
      %v705 = vld [vmem:[%s6 + $0x4] sm:$0xf]
      %v706 = vld [vmem:[%s6 + $0x8] sm:$0x1]
      %v707 = vpack.c.bf16 %v683, %v683
      %v708 = vpack.c.bf16 %v696, %v696
      %v712 = vunpack.c.l.b16 %v704
      %v713 = vunpack.c.l.b16 %v705
      %v714 = vunpack.c.l.b16 %v706
      %v715 = vpack.c.b16 %v713, %v712
      %v716 = vpack.c.b16 %v714, %v714
      %v718 = vsel %vm385, %v715, 0
      %v721 = vsel %vm385, %v716, 0
      %v724 = vsel %vm389, %v707, 0
      %v727 = vsel %vm389, %v708, 0
      %729 = vmatpush.bf16.msra.mxu0 0
      %730 = vmatpush.bf16.msra.mxu0 0
      %731 = vmatpush.bf16.msra.mxu0 0
      %732 = vmatpush.bf16.msra.mxu0 0
      %733 = vmatpush.bf16.msra.mxu0 0
      %734 = vmatpush.bf16.msra.mxu0 0
      %735 = vmatpush.bf16.msra.mxu0 0
      %736 = vmatpush.bf16.msra.mxu0 %v724
      %737 = vmatmul.bf16.gmra.mxu0 %v718
      %v738 = vpop.f32.mrf.mxu0
      %v739 = vadd.f32 0.0, %v738
      %v740 = vpop.f32.mrf.mxu0
      %v741 = vadd.f32 0.0, %v740
      %742 = vmatmul.bf16.gmra.mxu0 %v721
      %v743 = vpop.f32.mrf.mxu0
      %v744 = vadd.f32 0.0, %v743
      %v745 = vpop.f32.mrf.mxu0
      %746 = vdwg.mxu0
      %747 = vmatpush.bf16.msra.mxu0 0
      %748 = vmatpush.bf16.msra.mxu0 0
      %749 = vmatpush.bf16.msra.mxu0 0
      %750 = vmatpush.bf16.msra.mxu0 0
      %751 = vmatpush.bf16.msra.mxu0 0
      %752 = vmatpush.bf16.msra.mxu0 0
      %753 = vmatpush.bf16.msra.mxu0 0
      %754 = vmatpush.bf16.msra.mxu0 %v727
      %755 = vmatmul.bf16.gmra.mxu0 %v718
      %v756 = vpop.f32.mrf.mxu0
      %v757 = vadd.f32 0.0, %v756
      %v758 = vpop.f32.mrf.mxu0
      %v759 = vadd.f32 0.0, %v758
      %760 = vmatmul.bf16.gmra.mxu0 %v721
      %v761 = vpop.f32.mrf.mxu0
      %v762 = vadd.f32 0.0, %v761
      %v763 = vpop.f32.mrf.mxu0
      %764 = vdwg.mxu0
      %v768 = vunpack.c.l.b16 %v699
      %v769 = vunpack.c.l.b16 %v700
      %v770 = vunpack.c.l.b16 %v701
      %v771 = vpack.c.b16 %v769, %v768
      %v772 = vpack.c.b16 %v770, %v770
      %v774 = vsel %vm385, %v771, 0
      %v777 = vsel %vm385, %v772, 0
      %v780 = vsel %vm389, %v702, 0
      %v783 = vsel %vm389, %v703, 0
      %785 = vmatpush.bf16.msra.mxu0 0
      %786 = vmatpush.bf16.msra.mxu0 0
      %787 = vmatpush.bf16.msra.mxu0 0
      %788 = vmatpush.bf16.msra.mxu0 0
      %789 = vmatpush.bf16.msra.mxu0 0
      %790 = vmatpush.bf16.msra.mxu0 0
      %791 = vmatpush.bf16.msra.mxu0 0
      %792 = vmatpush.bf16.msra.mxu0 %v780
      %793 = vmatmul.bf16.gmra.mxu0 %v774
      %v794 = vpop.f32.mrf.mxu0
      %v795 = vadd.f32 %v739, %v794
      %v796 = vpop.f32.mrf.mxu0
      %v797 = vadd.f32 %v741, %v796
      %798 = vmatmul.bf16.gmra.mxu0 %v777
      %v799 = vpop.f32.mrf.mxu0
      %v800 = vadd.f32 %v744, %v799
      %v801 = vpop.f32.mrf.mxu0
      %802 = vdwg.mxu0
      %803 = vmatpush.bf16.msra.mxu0 0
      %804 = vmatpush.bf16.msra.mxu0 0
      %805 = vmatpush.bf16.msra.mxu0 0
      %806 = vmatpush.bf16.msra.mxu0 0
      %807 = vmatpush.bf16.msra.mxu0 0
      %808 = vmatpush.bf16.msra.mxu0 0
      %809 = vmatpush.bf16.msra.mxu0 0
      %810 = vmatpush.bf16.msra.mxu0 %v783
      %811 = vmatmul.bf16.gmra.mxu0 %v774
      %v812 = vpop.f32.mrf.mxu0
      %v813 = vadd.f32 %v757, %v812
      %v814 = vpop.f32.mrf.mxu0
      %v815 = vadd.f32 %v759, %v814
      %816 = vmatmul.bf16.gmra.mxu0 %v777
      %v817 = vpop.f32.mrf.mxu0
      %v818 = vadd.f32 %v762, %v817
      %v819 = vpop.f32.mrf.mxu0
      %820 = vdwg.mxu0
      %821 = vrot.lane.b32.xlu0 %v795, 17
      %v822 = vpop.permute.xlu0 %821
      %823 = vrot.lane.b32.xlu0 %v813, 17
      %v824 = vpop.permute.xlu0 %823
      %v825 = vlaneseq
      %v826 = vand.u32 %v825, 127
      %vm827 = vcmp.lt.s32.totalorder %v826, 17
      %v828 = vsel %vm827, %v822, %v824
      %v829 = vsel %vm827, %v824, %v822
      %v830 = vld [vmem:[%s9] ss:$8 sm:$0x3]
      %v832 = vperm.slane %v830, 0
      %v833 = vperm.slane %v830, 1
      %v836 = vmul.f32 %v829, %v832
      %v837 = vmul.f32 %v828, %v833
      %v840 = vrot.slane %v795, 2
      %v841 = vrot.slane %v813, 2
      %844 = vrot.lane.b32.xlu0 %v840, 16
      %v845 = vpop.permute.xlu0 %844
      %846 = vrot.lane.b32.xlu0 %v841, 16
      %v847 = vpop.permute.xlu0 %846
      %vm848 = vcmp.lt.s32.totalorder %v826, 16
      %v849 = vsel %vm848, %v845, %v847
      %v850 = vsel %vm848, %v847, %v845
      %s851 = scalar_lea.vmem %s9, 1
      %v852 = vld [vmem:[%s851] ss:$8 sm:$0x3]
      %v854 = vperm.slane %v852, 0
      %v855 = vperm.slane %v852, 1
      %v858 = vmul.f32 %v850, %v854
      %v859 = vmul.f32 %v849, %v855
      %v860 = vadd.f32 %v836, %v858
      %v861 = vadd.f32 %v837, %v859
      %v862 = vrot.slane %v795, 4
      %v863 = vrot.slane %v813, 4
      %866 = vrot.lane.b32.xlu0 %v862, 15
      %v867 = vpop.permute.xlu0 %866
      %868 = vrot.lane.b32.xlu0 %v863, 15
      %v869 = vpop.permute.xlu0 %868
      %vm870 = vcmp.lt.s32.totalorder %v826, 15
      %v871 = vsel %vm870, %v867, %v869
      %v872 = vsel %vm870, %v869, %v867
      %s873 = scalar_lea.vmem %s9, 2
      %v874 = vld [vmem:[%s873] ss:$8 sm:$0x3]
      %v876 = vperm.slane %v874, 0
      %v877 = vperm.slane %v874, 1
      %v880 = vmul.f32 %v872, %v876
      %v881 = vmul.f32 %v871, %v877
      %v882 = vadd.f32 %v860, %v880
      %v883 = vadd.f32 %v861, %v881
      %v884 = vrot.slane %v795, 6
      %v885 = vrot.slane %v813, 6
      %888 = vrot.lane.b32.xlu0 %v884, 1
      %v889 = vpop.permute.xlu0 %888
      %890 = vrot.lane.b32.xlu0 %v885, 1
      %v891 = vpop.permute.xlu0 %890
      %vm892 = vcmp.lt.s32.totalorder %v826, 1
      %v893 = vsel %vm892, %v889, %v891
      %v894 = vsel %vm892, %v891, %v889
      %s895 = scalar_lea.vmem %s9, 3
      %v896 = vld [vmem:[%s895] ss:$8 sm:$0x3]
      %v898 = vperm.slane %v896, 0
      %v899 = vperm.slane %v896, 1
      %v902 = vmul.f32 %v894, %v898
      %v903 = vmul.f32 %v893, %v899
      %v904 = vadd.f32 %v882, %v902
      %v905 = vadd.f32 %v883, %v903
      %v906 = vadd.f32 %v904, %v797
      %v907 = vadd.f32 %v905, %v815
      %v910 = vrot.slane %v797, 2
      %v911 = vrot.slane %v815, 2
      %914 = vrot.lane.b32.xlu0 %v910, 127
      %v915 = vpop.permute.xlu0 %914
      %916 = vrot.lane.b32.xlu0 %v911, 127
      %v917 = vpop.permute.xlu0 %916
      %vm918 = vcmp.lt.s32.totalorder %v826, 127
      %v919 = vsel %vm918, %v915, %v917
      %v920 = vsel %vm918, %v917, %v915
      %s921 = scalar_lea.vmem %s9, 5
      %v922 = vld [vmem:[%s921] ss:$8 sm:$0x3]
      %v924 = vperm.slane %v922, 0
      %v925 = vperm.slane %v922, 1
      %v928 = vmul.f32 %v919, %v924
      %v929 = vmul.f32 %v920, %v925
      %v930 = vadd.f32 %v906, %v928
      %v931 = vadd.f32 %v907, %v929
      %v932 = vrot.slane %v797, 4
      %v933 = vrot.slane %v815, 4
      %936 = vrot.lane.b32.xlu0 %v932, 113
      %v937 = vpop.permute.xlu0 %936
      %938 = vrot.lane.b32.xlu0 %v933, 113
      %v939 = vpop.permute.xlu0 %938
      %vm940 = vcmp.lt.s32.totalorder %v826, 113
      %v941 = vsel %vm940, %v937, %v939
      %v942 = vsel %vm940, %v939, %v937
      %s943 = scalar_lea.vmem %s9, 6
      %v944 = vld [vmem:[%s943] ss:$8 sm:$0x3]
      %v946 = vperm.slane %v944, 0
      %v947 = vperm.slane %v944, 1
      %v950 = vmul.f32 %v941, %v946
      %v951 = vmul.f32 %v942, %v947
      %v952 = vadd.f32 %v930, %v950
      %v953 = vadd.f32 %v931, %v951
      %v954 = vrot.slane %v797, 6
      %v955 = vrot.slane %v815, 6
      %958 = vrot.lane.b32.xlu0 %v954, 112
      %v959 = vpop.permute.xlu0 %958
      %960 = vrot.lane.b32.xlu0 %v955, 112
      %v961 = vpop.permute.xlu0 %960
      %vm962 = vcmp.lt.s32.totalorder %v826, 112
      %v963 = vsel %vm962, %v959, %v961
      %v964 = vsel %vm962, %v961, %v959
      %s965 = scalar_lea.vmem %s9, 7
      %v966 = vld [vmem:[%s965] ss:$8 sm:$0x3]
      %v968 = vperm.slane %v966, 0
      %v969 = vperm.slane %v966, 1
      %v972 = vmul.f32 %v963, %v968
      %v973 = vmul.f32 %v964, %v969
      %v974 = vadd.f32 %v952, %v972
      %v975 = vadd.f32 %v953, %v973
      %976 = vrot.lane.b32.xlu0 %v800, 111
      %v977 = vpop.permute.xlu0 %976
      %978 = vrot.lane.b32.xlu0 %v818, 111
      %v979 = vpop.permute.xlu0 %978
      %vm980 = vcmp.lt.s32.totalorder %v826, 111
      %v981 = vsel %vm980, %v977, %v979
      %v982 = vsel %vm980, %v979, %v977
      %s983 = scalar_lea.vmem %s9, 16
      %v984 = vld [vmem:[%s983] ss:$8 sm:$0x3]
      %v986 = vperm.slane %v984, 0
      %v987 = vperm.slane %v984, 1
      %v990 = vmul.f32 %v981, %v986
      %v991 = vmul.f32 %v982, %v987
      %v992 = vadd.f32 %v974, %v990
      %v993 = vadd.f32 %v975, %v991
      %v994 = vsel %vm389, %v992, 0.0
      %v995 = vsel %vm389, %v993, 0.0
      %v996 = vadd.f32 %v994, %v995
      %997 = vadd.xlane.f32.xlu0 %v996
      %v998 = vpop.xlane.xlu0 %997
      %v999 = vmul.f32 %v998, %v429
      %v1000 = vmul.f32 %v992, %v992
      %v1001 = vmul.f32 %v993, %v993
      %v1002 = vsel %vm389, %v1000, 0.0
      %v1003 = vsel %vm389, %v1001, 0.0
      %v1004 = vadd.f32 %v1002, %v1003
      %1005 = vadd.xlane.f32.xlu0 %v1004
      %v1006 = vpop.xlane.xlu0 %1005
      %v1007 = vmul.f32 %v1006, %v429
      %v1008 = vmul.f32 %v999, %v999
      %v1009 = vsub.f32 %v1007, %v1008
      %v1010 = vld [vmem:[%s7] sm:$0x3]
      %v1011 = vsub.f32 %v992, %v999
      %v1012 = vsub.f32 %v993, %v999
      %v1013 = vadd.f32 %v1009, 1e-05
      %v1014 = vrsqrt.pop %v1013
      %v1015 = vmul.f32 %v1014, %v1013
      %v1016 = vmul.f32 %v1015, %v1014
      %v1017 = vmul.f32 0.5, %v1016
      %v1018 = vsub.f32 1.5, %v1017
      %v1019 = vmul.f32 %v1014, %v1018
      %vm1020 = vweird.f32 %v1013
      %vm1021 = vweird.f32 %v1014
      %vm1022 = vmor %vm1020, %vm1021
      %v1023 = vsel %vm1022, %v1014, %v1019
      %v1024 = vmul.f32 %v1011, %v1023
      %v1025 = vmul.f32 %v1012, %v1023
      %1027 = vset.pattern.permute.xlu0 6
      %1028 = vperm.xlu0 %1027, %v1010
      %v1029 = vpop.permute.xlu0 %1028
      %v1031 = vmul.f32 %v1024, %v1029
      %v1032 = vmul.f32 %v1025, %v1029
      %1033 = vset.pattern.permute.xlu0 7
      %1034 = vperm.xlu0 %1033, %v1010
      %v1035 = vpop.permute.xlu0 %1034
      %v1037 = vadd.f32 %v1031, %v1035
      %v1038 = vadd.f32 %v1032, %v1035
      %v1039 = vtanh.pop %v1037
      %v1040 = vtanh.pop %v1038
      %s1041 = scalar_lea.vmem %s9, 17
      %v1042 = vld [vmem:[%s1041] ss:$8 sm:$0x3]
      %v1043 = vmul.f32 %v1039, 0.0625
      %v1044 = vmul.f32 %v1040, 0.0625
      %v1047 = vrot.slane %v1044, 7
      %vm1048 = vcmask 1040384
      %v1049 = vsel %vm1048, %v1043, %v1047
      %v1051 = vadd.f32 %v1042, %v1049
      %s1052 = scalar_lea.vmem %s9, 18
      %v1053 = vld [vmem:[%s1052] ss:$8 sm:$0x3]
      %1054 = vst [vmem:[#allocation1] sm:$0xff] %v1043
      %1055 = vst [vmem:[#allocation1 + $0x9] sm:$0xff] %v1044
      %s1056 = scalar_lea.vmem [#allocation1], 1
      %v1057 = vld [vmem:[%s1056] ss:$9 sm:$0xff]
      %v1059 = vadd.f32 %v1053, %v1057
      %v1060 = vadd.f32 %v1051, 1.0
      %v1061 = vmul.f32 %v1060, 3.5
      %v1062 = vadd.f32 %v1059, 1.0
      %v1063 = vmul.f32 %v1062, 3.5
      %v1064 = vfloor.f32 %v1061
      %v1065 = vfloor.f32 %v1063
      %v1066 = vsub.f32 %v1061, %v1064
      %v1067 = vsub.f32 %v1063, %v1065
      %v1068 = vcvt.f32.s32.to.zero.pseudo %v1064
      %v1069 = vcvt.f32.s32.to.zero.pseudo %v1065
      %vm1070 = vcmp.ge.s32.totalorder %v1068, 0
      %vm1071 = vcmp.lt.s32.totalorder %v1068, 8
      %vm1072 = vmand %vm1070, %vm1071
      %vm1073 = vcmp.ge.s32.totalorder %v1068, 4294967295
      %vm1074 = vcmp.lt.s32.totalorder %v1068, 7
      %vm1075 = vmand %vm1073, %vm1074
      %vm1076 = vcmp.ge.s32.totalorder %v1069, 0
      %vm1077 = vcmp.lt.s32.totalorder %v1069, 8
      %vm1078 = vmand %vm1076, %vm1077
      %vm1079 = vcmp.ge.s32.totalorder %v1069, 4294967295
      %vm1080 = vcmp.lt.s32.totalorder %v1069, 7
      %vm1081 = vmand %vm1079, %vm1080
      %vm1082 = vmand %vm1078, %vm1072
      %v1083 = vsub.f32 1.0, %v1066
      %v1084 = vsub.f32 1.0, %v1067
      %v1085 = vmul.f32 %v1083, %v1084
      %v1086 = vsel %vm1082, %v1085, 0.0
      %vm1087 = vmand %vm1078, %vm1075
      %v1088 = vmul.f32 %v1066, %v1084
      %v1089 = vsel %vm1087, %v1088, 0.0
      %vm1090 = vmand %vm1081, %vm1072
      %v1091 = vmul.f32 %v1083, %v1067
      %v1092 = vsel %vm1090, %v1091, 0.0
      %vm1093 = vmand %vm1081, %vm1075
      %v1094 = vmul.f32 %v1066, %v1067
      %v1095 = vsel %vm1093, %v1094, 0.0
      %v1096 = vmul.u32 %v1069, 8
      %v1097 = vadd.s32 %v1096, %v1068
      %v1098 = vlaneseq
      %v1099 = vshrl.u32 %v1098, 7
      %v1100 = vadd.s32 %v1099, 8
      %v1101 = vadd.s32 %v1099, 16
      %v1102 = vadd.s32 %v1099, 24
      %v1103 = vadd.s32 %v1099, 32
      %v1104 = vadd.s32 %v1099, 40
      %v1105 = vadd.s32 %v1099, 48
      %v1106 = vadd.s32 %v1099, 56
      %v1107 = vperm.slane %v1097, 0
      %v1108 = vperm.slane %v1097, 1
      %v1109 = vsub.s32 %v1099, %v1107
      %v1110 = vsub.s32 %v1099, %v1108
      %v1111 = vsub.s32 %v1100, %v1107
      %v1112 = vsub.s32 %v1100, %v1108
      %v1113 = vsub.s32 %v1101, %v1107
      %v1114 = vsub.s32 %v1101, %v1108
      %v1115 = vsub.s32 %v1102, %v1107
      %v1116 = vsub.s32 %v1102, %v1108
      %v1117 = vsub.s32 %v1103, %v1107
      %v1118 = vsub.s32 %v1103, %v1108
      %v1119 = vsub.s32 %v1104, %v1107
      %v1120 = vsub.s32 %v1104, %v1108
      %v1121 = vsub.s32 %v1105, %v1107
      %v1122 = vsub.s32 %v1105, %v1108
      %v1123 = vsub.s32 %v1106, %v1107
      %v1124 = vsub.s32 %v1106, %v1108
      %vm1125 = vcmp.eq.s32.totalorder %v1109, 0
      %vm1126 = vcmp.eq.s32.totalorder %v1110, 0
      %vm1127 = vcmp.eq.s32.totalorder %v1111, 0
      %vm1128 = vcmp.eq.s32.totalorder %v1112, 0
      %vm1129 = vcmp.eq.s32.totalorder %v1113, 0
      %vm1130 = vcmp.eq.s32.totalorder %v1114, 0
      %vm1131 = vcmp.eq.s32.totalorder %v1115, 0
      %vm1132 = vcmp.eq.s32.totalorder %v1116, 0
      %vm1133 = vcmp.eq.s32.totalorder %v1117, 0
      %vm1134 = vcmp.eq.s32.totalorder %v1118, 0
      %vm1135 = vcmp.eq.s32.totalorder %v1119, 0
      %vm1136 = vcmp.eq.s32.totalorder %v1120, 0
      %vm1137 = vcmp.eq.s32.totalorder %v1121, 0
      %vm1138 = vcmp.eq.s32.totalorder %v1122, 0
      %vm1139 = vcmp.eq.s32.totalorder %v1123, 0
      %vm1140 = vcmp.eq.s32.totalorder %v1124, 0
      %v1142 = vperm.slane %v1086, 0
      %v1143 = vperm.slane %v1086, 1
      %v1146 = vsel %vm1125, %v1142, 0.0
      %v1147 = vsel %vm1126, %v1143, 0.0
      %v1148 = vsel %vm1127, %v1142, 0.0
      %v1149 = vsel %vm1128, %v1143, 0.0
      %v1150 = vsel %vm1129, %v1142, 0.0
      %v1151 = vsel %vm1130, %v1143, 0.0
      %v1152 = vsel %vm1131, %v1142, 0.0
      %v1153 = vsel %vm1132, %v1143, 0.0
      %v1154 = vsel %vm1133, %v1142, 0.0
      %v1155 = vsel %vm1134, %v1143, 0.0
      %v1156 = vsel %vm1135, %v1142, 0.0
      %v1157 = vsel %vm1136, %v1143, 0.0
      %v1158 = vsel %vm1137, %v1142, 0.0
      %v1159 = vsel %vm1138, %v1143, 0.0
      %v1160 = vsel %vm1139, %v1142, 0.0
      %v1161 = vsel %vm1140, %v1143, 0.0
      %vm1162 = vcmp.eq.s32.totalorder %v1109, 1
      %vm1163 = vcmp.eq.s32.totalorder %v1110, 1
      %vm1164 = vcmp.eq.s32.totalorder %v1111, 1
      %vm1165 = vcmp.eq.s32.totalorder %v1112, 1
      %vm1166 = vcmp.eq.s32.totalorder %v1113, 1
      %vm1167 = vcmp.eq.s32.totalorder %v1114, 1
      %vm1168 = vcmp.eq.s32.totalorder %v1115, 1
      %vm1169 = vcmp.eq.s32.totalorder %v1116, 1
      %vm1170 = vcmp.eq.s32.totalorder %v1117, 1
      %vm1171 = vcmp.eq.s32.totalorder %v1118, 1
      %vm1172 = vcmp.eq.s32.totalorder %v1119, 1
      %vm1173 = vcmp.eq.s32.totalorder %v1120, 1
      %vm1174 = vcmp.eq.s32.totalorder %v1121, 1
      %vm1175 = vcmp.eq.s32.totalorder %v1122, 1
      %vm1176 = vcmp.eq.s32.totalorder %v1123, 1
      %vm1177 = vcmp.eq.s32.totalorder %v1124, 1
      %v1179 = vperm.slane %v1089, 0
      %v1180 = vperm.slane %v1089, 1
      %v1183 = vsel %vm1162, %v1179, 0.0
      %v1184 = vsel %vm1163, %v1180, 0.0
      %v1185 = vsel %vm1164, %v1179, 0.0
      %v1186 = vsel %vm1165, %v1180, 0.0
      %v1187 = vsel %vm1166, %v1179, 0.0
      %v1188 = vsel %vm1167, %v1180, 0.0
      %v1189 = vsel %vm1168, %v1179, 0.0
      %v1190 = vsel %vm1169, %v1180, 0.0
      %v1191 = vsel %vm1170, %v1179, 0.0
      %v1192 = vsel %vm1171, %v1180, 0.0
      %v1193 = vsel %vm1172, %v1179, 0.0
      %v1194 = vsel %vm1173, %v1180, 0.0
      %v1195 = vsel %vm1174, %v1179, 0.0
      %v1196 = vsel %vm1175, %v1180, 0.0
      %v1197 = vsel %vm1176, %v1179, 0.0
      %v1198 = vsel %vm1177, %v1180, 0.0
      %v1199 = vadd.f32 %v1146, %v1183
      %v1200 = vadd.f32 %v1147, %v1184
      %v1201 = vadd.f32 %v1148, %v1185
      %v1202 = vadd.f32 %v1149, %v1186
      %v1203 = vadd.f32 %v1150, %v1187
      %v1204 = vadd.f32 %v1151, %v1188
      %v1205 = vadd.f32 %v1152, %v1189
      %v1206 = vadd.f32 %v1153, %v1190
      %v1207 = vadd.f32 %v1154, %v1191
      %v1208 = vadd.f32 %v1155, %v1192
      %v1209 = vadd.f32 %v1156, %v1193
      %v1210 = vadd.f32 %v1157, %v1194
      %v1211 = vadd.f32 %v1158, %v1195
      %v1212 = vadd.f32 %v1159, %v1196
      %v1213 = vadd.f32 %v1160, %v1197
      %v1214 = vadd.f32 %v1161, %v1198
      %vm1215 = vcmp.eq.s32.totalorder %v1109, 8
      %vm1216 = vcmp.eq.s32.totalorder %v1110, 8
      %vm1217 = vcmp.eq.s32.totalorder %v1111, 8
      %vm1218 = vcmp.eq.s32.totalorder %v1112, 8
      %vm1219 = vcmp.eq.s32.totalorder %v1113, 8
      %vm1220 = vcmp.eq.s32.totalorder %v1114, 8
      %vm1221 = vcmp.eq.s32.totalorder %v1115, 8
      %vm1222 = vcmp.eq.s32.totalorder %v1116, 8
      %vm1223 = vcmp.eq.s32.totalorder %v1117, 8
      %vm1224 = vcmp.eq.s32.totalorder %v1118, 8
      %vm1225 = vcmp.eq.s32.totalorder %v1119, 8
      %vm1226 = vcmp.eq.s32.totalorder %v1120, 8
      %vm1227 = vcmp.eq.s32.totalorder %v1121, 8
      %vm1228 = vcmp.eq.s32.totalorder %v1122, 8
      %vm1229 = vcmp.eq.s32.totalorder %v1123, 8
      %vm1230 = vcmp.eq.s32.totalorder %v1124, 8
      %v1232 = vperm.slane %v1092, 0
      %v1233 = vperm.slane %v1092, 1
      %v1236 = vsel %vm1215, %v1232, 0.0
      %v1237 = vsel %vm1216, %v1233, 0.0
      %v1238 = vsel %vm1217, %v1232, 0.0
      %v1239 = vsel %vm1218, %v1233, 0.0
      %v1240 = vsel %vm1219, %v1232, 0.0
      %v1241 = vsel %vm1220, %v1233, 0.0
      %v1242 = vsel %vm1221, %v1232, 0.0
      %v1243 = vsel %vm1222, %v1233, 0.0
      %v1244 = vsel %vm1223, %v1232, 0.0
      %v1245 = vsel %vm1224, %v1233, 0.0
      %v1246 = vsel %vm1225, %v1232, 0.0
      %v1247 = vsel %vm1226, %v1233, 0.0
      %v1248 = vsel %vm1227, %v1232, 0.0
      %v1249 = vsel %vm1228, %v1233, 0.0
      %v1250 = vsel %vm1229, %v1232, 0.0
      %v1251 = vsel %vm1230, %v1233, 0.0
      %v1252 = vadd.f32 %v1199, %v1236
      %v1253 = vadd.f32 %v1200, %v1237
      %v1254 = vadd.f32 %v1201, %v1238
      %v1255 = vadd.f32 %v1202, %v1239
      %v1256 = vadd.f32 %v1203, %v1240
      %v1257 = vadd.f32 %v1204, %v1241
      %v1258 = vadd.f32 %v1205, %v1242
      %v1259 = vadd.f32 %v1206, %v1243
      %v1260 = vadd.f32 %v1207, %v1244
      %v1261 = vadd.f32 %v1208, %v1245
      %v1262 = vadd.f32 %v1209, %v1246
      %v1263 = vadd.f32 %v1210, %v1247
      %v1264 = vadd.f32 %v1211, %v1248
      %v1265 = vadd.f32 %v1212, %v1249
      %v1266 = vadd.f32 %v1213, %v1250
      %v1267 = vadd.f32 %v1214, %v1251
      %vm1268 = vcmp.eq.s32.totalorder %v1109, 9
      %vm1269 = vcmp.eq.s32.totalorder %v1110, 9
      %vm1270 = vcmp.eq.s32.totalorder %v1111, 9
      %vm1271 = vcmp.eq.s32.totalorder %v1112, 9
      %vm1272 = vcmp.eq.s32.totalorder %v1113, 9
      %vm1273 = vcmp.eq.s32.totalorder %v1114, 9
      %vm1274 = vcmp.eq.s32.totalorder %v1115, 9
      %vm1275 = vcmp.eq.s32.totalorder %v1116, 9
      %vm1276 = vcmp.eq.s32.totalorder %v1117, 9
      %vm1277 = vcmp.eq.s32.totalorder %v1118, 9
      %vm1278 = vcmp.eq.s32.totalorder %v1119, 9
      %vm1279 = vcmp.eq.s32.totalorder %v1120, 9
      %vm1280 = vcmp.eq.s32.totalorder %v1121, 9
      %vm1281 = vcmp.eq.s32.totalorder %v1122, 9
      %vm1282 = vcmp.eq.s32.totalorder %v1123, 9
      %vm1283 = vcmp.eq.s32.totalorder %v1124, 9
      %v1285 = vperm.slane %v1095, 0
      %v1286 = vperm.slane %v1095, 1
      %v1289 = vsel %vm1268, %v1285, 0.0
      %v1290 = vsel %vm1269, %v1286, 0.0
      %v1291 = vsel %vm1270, %v1285, 0.0
      %v1292 = vsel %vm1271, %v1286, 0.0
      %v1293 = vsel %vm1272, %v1285, 0.0
      %v1294 = vsel %vm1273, %v1286, 0.0
      %v1295 = vsel %vm1274, %v1285, 0.0
      %v1296 = vsel %vm1275, %v1286, 0.0
      %v1297 = vsel %vm1276, %v1285, 0.0
      %v1298 = vsel %vm1277, %v1286, 0.0
      %v1299 = vsel %vm1278, %v1285, 0.0
      %v1300 = vsel %vm1279, %v1286, 0.0
      %v1301 = vsel %vm1280, %v1285, 0.0
      %v1302 = vsel %vm1281, %v1286, 0.0
      %v1303 = vsel %vm1282, %v1285, 0.0
      %v1304 = vsel %vm1283, %v1286, 0.0
      %v1305 = vadd.f32 %v1252, %v1289
      %v1306 = vadd.f32 %v1253, %v1290
      %v1307 = vadd.f32 %v1254, %v1291
      %v1308 = vadd.f32 %v1255, %v1292
      %v1309 = vadd.f32 %v1256, %v1293
      %v1310 = vadd.f32 %v1257, %v1294
      %v1311 = vadd.f32 %v1258, %v1295
      %v1312 = vadd.f32 %v1259, %v1296
      %v1313 = vadd.f32 %v1260, %v1297
      %v1314 = vadd.f32 %v1261, %v1298
      %v1315 = vadd.f32 %v1262, %v1299
      %v1316 = vadd.f32 %v1263, %v1300
      %v1317 = vadd.f32 %v1264, %v1301
      %v1318 = vadd.f32 %v1265, %v1302
      %v1319 = vadd.f32 %v1266, %v1303
      %v1320 = vadd.f32 %v1267, %v1304
      %v1321 = vpack.c.bf16 %v1307, %v1305
      %v1322 = vpack.c.bf16 %v1308, %v1306
      %v1323 = vpack.c.bf16 %v1311, %v1309
      %v1324 = vpack.c.bf16 %v1312, %v1310
      %v1325 = vpack.c.bf16 %v1315, %v1313
      %v1326 = vpack.c.bf16 %v1316, %v1314
      %v1327 = vpack.c.bf16 %v1319, %v1317
      %v1328 = vpack.c.bf16 %v1320, %v1318
      %v1329 = vsel %vm669, %v379, 0
      %1331 = vmatpush.bf16.msra.mxu0 0
      %1332 = vmatpush.bf16.msra.mxu0 0
      %1333 = vmatpush.bf16.msra.mxu0 0
      %1334 = vmatpush.bf16.msra.mxu0 0
      %1335 = vmatpush.bf16.msra.mxu0 %v1327
      %1336 = vmatpush.bf16.msra.mxu0 %v1325
      %1337 = vmatpush.bf16.msra.mxu0 %v1323
      %1338 = vmatpush.bf16.msra.mxu0 %v1321
      %1339 = vmatmul.bf16.gmra.mxu0 %v1329
      %v1340 = vpop.f32.mrf.mxu0
      %v1341 = vadd.f32 %v468, %v1340
      %v1342 = vpop.f32.mrf.mxu0
      %1343 = vdwg.mxu0
      %1344 = vmatpush.bf16.msra.mxu0 0
      %1345 = vmatpush.bf16.msra.mxu0 0
      %1346 = vmatpush.bf16.msra.mxu0 0
      %1347 = vmatpush.bf16.msra.mxu0 0
      %1348 = vmatpush.bf16.msra.mxu0 %v1328
      %1349 = vmatpush.bf16.msra.mxu0 %v1326
      %1350 = vmatpush.bf16.msra.mxu0 %v1324
      %1351 = vmatpush.bf16.msra.mxu0 %v1322
      %1352 = vmatmul.bf16.gmra.mxu0 %v1329
      %v1353 = vpop.f32.mrf.mxu0
      %v1354 = vadd.f32 %v469, %v1353
      %v1355 = vpop.f32.mrf.mxu0
      %1356 = vdwg.mxu0
      %1357 = vst [vmem:[%s376] sm:$0xff] %v1341
      %1358 = vst [vmem:[%s376 + $0x8] sm:$0xff] %v1354
      %p1359 = scmp.lt.s32.totalorder %s21, 1
      %s1360 = scalar_select %p1359, %s21, 1
      %s1361 = smul.addr %s1360, 2
      %s1362 = smul.addr %s1361, 8
      %s1363 = scalar_lea.vmem %s10, %s1362
      // Predicated region
      $region61: #{flow_upsample_forward.1} parent=59 // pred_check
        %p1364 = pneg %p259
      $region62: #{flow_upsample_forward.1} parent=59 // pred_check_branch
        %1366 = sbr.rel (%p1364) target = $region64
      $region63: #{flow_upsample_forward.1} parent=59 // pred_region
        _
      $region64: #{flow_upsample_forward.1} parent=59 // pred_fallthru
        _
    $region60: #{flow_upsample_forward.1} parent=5 // pred_fallthru
      _
    %p1367 = scmp.le.s32.totalorder 2, %s16
    // Predicated region
    $region65: #{flow_upsample_forward.1} parent=5 // pred_check
      %p1368 = pneg %p1367
    $region66: #{flow_upsample_forward.1} parent=5 // pred_check_branch
      %1370 = sbr.rel (%p1368) target = $region68
    $region67: #{flow_upsample_forward.1} parent=5 // pred_region
      %s1371 = ssub.s32 %s16, 2
      // Predicated region
      $region69: #{flow_upsample_forward.1} parent=67 // pred_check
        %p1372 = pneg %p265
      $region70: #{flow_upsample_forward.1} parent=67 // pred_check_branch
        %1374 = sbr.rel (%p1372) target = $region72
      $region71: #{flow_upsample_forward.1} parent=67 // pred_region
        %p1375 = scmp.lt.s32.totalorder %s22, 1
        %s1376 = scalar_select %p1375, %s22, 1
        %s1377 = smul.addr %s1376, 2
        %s1378 = smul.addr %s1377, 8
        %s1379 = scalar_lea.vmem %s10, %s1378
      $region72: #{flow_upsample_forward.1} parent=67 // pred_fallthru
        _
    $region68: #{flow_upsample_forward.1} parent=5 // pred_fallthru
      _
  $region6: #{flow_upsample_forward.1} parent=0 // loop_footer
    %s20 = sadd.s32 1, %s16
  $region7: #{flow_upsample_forward.1} parent=0 // loop_footer_branch
    %15 = sbr.rel target = $region3
  $region8: #{flow_upsample_forward.1} parent=0 // loop_exit
    _

</llo_original>
